<compile_context>
chip_gen: v7x
topology: tpu7x:2x2x1
jax: 0.10.0
libtpu: 0.0.40
codegen_flags: <defaults>
</compile_context>

<pallas_src>
import jax
import jax.numpy as jnp
from jax.experimental import pallas as pl
from jax.experimental.pallas import tpu as pltpu

LANE = 128  # TPU lane width


def _round_up(n, m):
    return (n + m - 1) // m * m


def _pick_tile(batch):
    # Keep >=2 grid steps when the batch allows (v7x has 2 TensorCores; the
    # "parallel" batch axis is what shards across them); tiles up to 512 rows
    # to fill the v6e 256x256 MXU M-dim and amortize per-step overhead.
    for tb in (512, 256, 128):
        if batch >= 2 * tb:
            return tb
    return 128


# ----------------------------- Pallas kernel --------------------------------
def _vae_fwd_kernel(x_ref, eps_ref,
                    w1_ref, b1_ref, wm_ref, bm_ref, wv_ref, bv_ref,
                    w2_ref, b2_ref, w3_ref, b3_ref,
                    xdec_ref, zmean_ref, zlogvar_ref, z_ref):
    # ---- encoder: h = relu(x @ w1 + b1)  (bf16 operands, f32 MXU accumulation) ----
    x = x_ref[...]                                               # (TB, D_in) bf16
    h = jnp.dot(x, w1_ref[...], preferred_element_type=jnp.float32) + b1_ref[...]
    h = jnp.maximum(h, 0.0)                                      # f32 ReLU (VPU)
    hb = h.astype(jnp.bfloat16)                                  # (TB, H_pad)

    z_mean = jnp.dot(hb, wm_ref[...], preferred_element_type=jnp.float32) + bm_ref[...]
    z_log_var = jnp.dot(hb, wv_ref[...], preferred_element_type=jnp.float32) + bv_ref[...]

    # ---- sampling: z = z_mean + exp(0.5 * z_log_var) * eps  (exact-width, f32) ----
    z = z_mean + jnp.exp(0.5 * z_log_var) * eps_ref[...]

    # ---- decoder(z_mean): matches BaseVariationalAutoencoder.forward ----
    zb = z_mean.astype(jnp.bfloat16)                             # (TB, L)
    hd = jnp.dot(zb, w2_ref[...], preferred_element_type=jnp.float32) + b2_ref[...]
    hd = jnp.maximum(hd, 0.0)
    hdb = hd.astype(jnp.bfloat16)                                # (TB, H_pad)
    x_dec = jnp.dot(hdb, w3_ref[...], preferred_element_type=jnp.float32) + b3_ref[...]

    xdec_ref[...] = x_dec                                        # (TB, D_in)
    zmean_ref[...] = z_mean                                      # (TB, L)
    zlogvar_ref[...] = z_log_var
    z_ref[...] = z


# ------------------------------- wrapper -------------------------------------
def vae_forward(X, params_padded, latent_dim, hidden_pad, key):
    """X: (B, seq_len, feat_dim) float32. Returns (x_decoded, z_mean, z_log_var, z)."""
    B, S, F = X.shape
    D_in = S * F
    H_pad = hidden_pad
    L = latent_dim

    TB = _pick_tile(B)
    B_pad = _round_up(B, TB)

    # nn.Flatten (row-major) + cast; no lane padding (block last dim == full dim).
    x = X.reshape(B, D_in).astype(jnp.bfloat16)
    # epsilon ~ N(0,1), same semantics as torch.randn in Sampling.forward
    eps = jax.random.normal(key, (B, L), jnp.float32)
    if B_pad != B:
        x = jnp.pad(x, ((0, B_pad - B), (0, 0)))
        eps = jnp.pad(eps, ((0, B_pad - B), (0, 0)))

    (w1, b1, wm, bm, wv, bv, w2, b2, w3, b3) = params_padded

    grid = (B_pad // TB,)

    def row_map(i):      # x / eps / outputs follow the batch axis
        return (i, 0)

    def const_map(i):    # weights & biases: DMA'd once, resident in VMEM
        return (0, 0)

    in_specs = [
        pl.BlockSpec((TB, D_in), row_map),                  # x
        pl.BlockSpec((TB, L), row_map),                     # eps
        pl.BlockSpec((D_in, H_pad), const_map),             # w1  (K exact, N padded)
        pl.BlockSpec((1, H_pad), const_map),                # b1
        pl.BlockSpec((H_pad, L), const_map),                # wm  (K padded, N exact)
        pl.BlockSpec((1, L), const_map),                    # bm
        pl.BlockSpec((H_pad, L), const_map),                # wv
        pl.BlockSpec((1, L), const_map),                    # bv
        pl.BlockSpec((L, H_pad), const_map),                # w2  (K exact, N padded)
        pl.BlockSpec((1, H_pad), const_map),                # b2
        pl.BlockSpec((H_pad, D_in), const_map),             # w3  (K padded, N exact)
        pl.BlockSpec((1, D_in), const_map),                 # b3
    ]
    out_specs = [
        pl.BlockSpec((TB, D_in), row_map),                  # x_decoded (flat, exact width)
        pl.BlockSpec((TB, L), row_map),                     # z_mean
        pl.BlockSpec((TB, L), row_map),                     # z_log_var
        pl.BlockSpec((TB, L), row_map),                     # z
    ]
    out_shapes = (
        jax.ShapeDtypeStruct((B_pad, D_in), jnp.float32),
        jax.ShapeDtypeStruct((B_pad, L), jnp.float32),
        jax.ShapeDtypeStruct((B_pad, L), jnp.float32),
        jax.ShapeDtypeStruct((B_pad, L), jnp.float32),
    )

    # Advisory cost estimate (tiny, launch-overhead-dominated kernel).
    flops = 2 * B_pad * (D_in * H_pad + 2 * H_pad * L + L * H_pad + H_pad * D_in)
    transcendentals = B_pad * L
    param_bytes = sum(int(p.size) * p.dtype.itemsize for p in params_padded)
    bytes_accessed = (int(x.size) * 2 + int(eps.size) * 4 + param_bytes
                      + B_pad * (D_in + 3 * L) * 4)

    x_dec_p, z_mean_p, z_log_var_p, z_p = pl.pallas_call(
        _vae_fwd_kernel,
        out_shape=out_shapes,
        grid=grid,
        in_specs=in_specs,
        out_specs=out_specs,
        compiler_params=pltpu.CompilerParams(
            dimension_semantics=("parallel",),   # shard batch tiles across TCs (v7x)
        ),
        cost_estimate=pl.CostEstimate(
            flops=int(flops),
            transcendentals=int(transcendentals),
            bytes_accessed=int(bytes_accessed),
        ),
    )(x, eps, w1, b1, wm, bm, wv, bv, w2, b2, w3, b3)

    if B_pad != B:
        x_dec_p = x_dec_p[:B]
        z_mean_p = z_mean_p[:B]
        z_log_var_p = z_log_var_p[:B]
        z_p = z_p[:B]

    x_decoded = x_dec_p.reshape(B, S, F)   # free bitcast reshape
    return x_decoded, z_mean_p, z_log_var_p, z_p


# --------------------------- params: init + padding ---------------------------
def init_params(key, seq_len, feat_dim, latent_dim, hidden):
    D_in = seq_len * feat_dim
    ks = jax.random.split(key, 10)

    def lin(kw, kb, fan_in, fan_out):
        # PyTorch nn.Linear default init: U(-1/sqrt(fan_in), 1/sqrt(fan_in))
        bound = 1.0 / jnp.sqrt(fan_in)
        w = jax.random.uniform(kw, (fan_in, fan_out), jnp.float32, -bound, bound)
        b = jax.random.uniform(kb, (1, fan_out), jnp.float32, -bound, bound)
        return w, b

    w1, b1 = lin(ks[0], ks[1], D_in, hidden)          # encoder hidden
    wm, bm = lin(ks[2], ks[3], hidden, latent_dim)    # z_mean head
    wv, bv = lin(ks[4], ks[5], hidden, latent_dim)    # z_log_var head
    w2, b2 = lin(ks[6], ks[7], latent_dim, hidden)    # decoder hidden
    w3, b3 = lin(ks[8], ks[9], hidden, D_in)          # decoder output
    return (w1, b1, wm, bm, wv, bv, w2, b2, w3, b3)


def prepare_params(params, seq_len, feat_dim, latent_dim, hidden):
    """One-time: pad only the hidden dim (K or N) to a lane multiple; latent and
    D_in stay exact-width.  Weights -> bf16, biases -> f32."""
    D_in = seq_len * feat_dim
    H_pad = _round_up(hidden, LANE)
    (w1, b1, wm, bm, wv, bv, w2, b2, w3, b3) = params

    def pad_w(w, r, c):
        out = jnp.zeros((r, c), jnp.bfloat16)
        return out.at[: w.shape[0], : w.shape[1]].set(w.astype(jnp.bfloat16))

    def pad_b(b, c):
        out = jnp.zeros((1, c), jnp.float32)
        return out.at[:, : b.shape[1]].set(b)

    padded = (
        pad_w(w1, D_in, H_pad),       pad_b(b1, H_pad),        # (32,128), (1,128)
        pad_w(wm, H_pad, latent_dim), pad_b(bm, latent_dim),   # (128,8),  (1,8)
        pad_w(wv, H_pad, latent_dim), pad_b(bv, latent_dim),   # (128,8),  (1,8)
        pad_w(w2, latent_dim, H_pad), pad_b(b2, H_pad),        # (8,128),  (1,128)
        pad_w(w3, H_pad, D_in),       pad_b(b3, D_in),         # (128,32), (1,32)
    )
    return padded, H_pad


# ----------------------- pure-JAX reference (bf16-matched) --------------------
def reference_forward(X, params, eps):
    (w1, b1, wm, bm, wv, bv, w2, b2, w3, b3) = params
    bf = lambda a: a.astype(jnp.bfloat16).astype(jnp.float32)
    B, S, F = X.shape
    x = bf(X.reshape(B, S * F))
    h = jnp.maximum(x @ bf(w1) + b1, 0.0)
    hb = bf(h)
    z_mean = hb @ bf(wm) + bm
    z_log_var = hb @ bf(wv) + bv
    z = z_mean + jnp.exp(0.5 * z_log_var) * eps
    zb = bf(z_mean)
    hd = jnp.maximum(zb @ bf(w2) + b2, 0.0)
    x_dec = bf(hd) @ bf(w3) + b3
    return x_dec.reshape(B, S, F), z_mean, z_log_var, z


# --------------------------------- main --------------------------------------
if __name__ == "__main__":
    # TimeVAE hyper-params (small dense model).
    seq_len, feat_dim, latent_dim, hidden = 8, 4, 8, 32
    batch = 256

    key = jax.random.PRNGKey(0)
    k_x, k_p, k_eps = jax.random.split(key, 3)

    X = jax.random.normal(k_x, (batch, seq_len, feat_dim), jnp.float32)
    params = init_params(k_p, seq_len, feat_dim, latent_dim, hidden)
    params_padded, hidden_pad = prepare_params(params, seq_len, feat_dim, latent_dim, hidden)

    x_decoded, z_mean, z_log_var, z = vae_forward(X, params_padded, latent_dim, hidden_pad, k_eps)
    jax.block_until_ready((x_decoded, z_mean, z_log_var, z))

    assert x_decoded.shape == (batch, seq_len, feat_dim)
    assert z_mean.shape == (batch, latent_dim)
    assert z_log_var.shape == (batch, latent_dim)
    assert z.shape == (batch, latent_dim)

    # numerical check against a bf16-matched pure-JAX reference (same eps)
    eps = jax.random.normal(k_eps, (batch, latent_dim), jnp.float32)
    x_dec_r, z_mean_r, z_log_var_r, z_r = reference_forward(X, params, eps)
    assert float(jnp.max(jnp.abs(x_decoded - x_dec_r))) < 1e-2
    assert float(jnp.max(jnp.abs(z_mean - z_mean_r))) < 1e-2
    assert float(jnp.max(jnp.abs(z_log_var - z_log_var_r))) < 1e-2
    assert float(jnp.max(jnp.abs(z - z_r))) < 1e-2

    print("KERNEL_OK")
</pallas_src>

<mosaic_0001>
module attributes {stable_mosaic.version = 11 : i64} {
  func.func @_vae_fwd_kernel(%arg0: i32, %arg1: memref<128x32xbf16, #tpu.memory_space<vmem>>, %arg2: memref<128x8xf32, #tpu.memory_space<vmem>>, %arg3: memref<32x128xbf16, #tpu.memory_space<vmem>>, %arg4: memref<1x128xf32, #tpu.memory_space<vmem>>, %arg5: memref<128x8xbf16, #tpu.memory_space<vmem>>, %arg6: memref<1x8xf32, #tpu.memory_space<vmem>>, %arg7: memref<128x8xbf16, #tpu.memory_space<vmem>>, %arg8: memref<1x8xf32, #tpu.memory_space<vmem>>, %arg9: memref<8x128xbf16, #tpu.memory_space<vmem>>, %arg10: memref<1x128xf32, #tpu.memory_space<vmem>>, %arg11: memref<128x32xbf16, #tpu.memory_space<vmem>>, %arg12: memref<1x32xf32, #tpu.memory_space<vmem>>, %arg13: memref<128x32xf32, #tpu.memory_space<vmem>>, %arg14: memref<128x8xf32, #tpu.memory_space<vmem>>, %arg15: memref<128x8xf32, #tpu.memory_space<vmem>>, %arg16: memref<128x8xf32, #tpu.memory_space<vmem>>) attributes {dimension_semantics = [#tpu.dimension_semantics<parallel>], iteration_bounds = array<i64: 2>, scalar_prefetch = 0 : i64, scratch_operands = 0 : i64, tpu.core_type = #tpu.core_type<tc>, window_params = [{transform_indices = @transform_0, window_bounds = array<i64: 128, 32>}, {transform_indices = @transform_1, window_bounds = array<i64: 128, 8>}, {pipeline_mode = #tpu.pipeline_mode<synchronous>, transform_indices = @transform_2, window_bounds = array<i64: 32, 128>}, {pipeline_mode = #tpu.pipeline_mode<synchronous>, transform_indices = @transform_3, window_bounds = array<i64: 1, 128>}, {pipeline_mode = #tpu.pipeline_mode<synchronous>, transform_indices = @transform_4, window_bounds = array<i64: 128, 8>}, {pipeline_mode = #tpu.pipeline_mode<synchronous>, transform_indices = @transform_5, window_bounds = array<i64: 1, 8>}, {pipeline_mode = #tpu.pipeline_mode<synchronous>, transform_indices = @transform_6, window_bounds = array<i64: 128, 8>}, {pipeline_mode = #tpu.pipeline_mode<synchronous>, transform_indices = @transform_7, window_bounds = array<i64: 1, 8>}, {pipeline_mode = #tpu.pipeline_mode<synchronous>, transform_indices = @transform_8, window_bounds = array<i64: 8, 128>}, {pipeline_mode = #tpu.pipeline_mode<synchronous>, transform_indices = @transform_9, window_bounds = array<i64: 1, 128>}, {pipeline_mode = #tpu.pipeline_mode<synchronous>, transform_indices = @transform_10, window_bounds = array<i64: 128, 32>}, {pipeline_mode = #tpu.pipeline_mode<synchronous>, transform_indices = @transform_11, window_bounds = array<i64: 1, 32>}, {transform_indices = @transform_12, window_bounds = array<i64: 128, 32>}, {transform_indices = @transform_13, window_bounds = array<i64: 128, 8>}, {transform_indices = @transform_14, window_bounds = array<i64: 128, 8>}, {transform_indices = @transform_15, window_bounds = array<i64: 128, 8>}]} {
    %c0 = arith.constant 0 : index
    %c0_0 = arith.constant 0 : index
    %0 = vector.load %arg1[%c0, %c0_0] : memref<128x32xbf16, #tpu.memory_space<vmem>>, vector<128x32xbf16>
    %c0_1 = arith.constant 0 : index
    %c0_2 = arith.constant 0 : index
    %1 = vector.load %arg3[%c0_1, %c0_2] : memref<32x128xbf16, #tpu.memory_space<vmem>>, vector<32x128xbf16>
    %cst = arith.constant dense<0.000000e+00> : vector<128x128xf32>
    %2 = tpu.matmul %0, %1, %cst {dimension_numbers = #tpu.dot_dimension_numbers<[1], [0], [0], [1], [0, 0, 1, 1], [], []>} : vector<128x32xbf16>, vector<32x128xbf16>, vector<128x128xf32> -> vector<128x128xf32>
    %c0_3 = arith.constant 0 : index
    %c0_4 = arith.constant 0 : index
    %3 = vector.load %arg4[%c0_3, %c0_4] : memref<1x128xf32, #tpu.memory_space<vmem>>, vector<1x128xf32>
    %4 = vector.broadcast %3 : vector<1x128xf32> to vector<128x128xf32>
    %5 = arith.addf %2, %4 : vector<128x128xf32>
    %cst_5 = arith.constant 0.000000e+00 : f32
    %6 = vector.broadcast %cst_5 : f32 to vector<128x128xf32>
    %7 = arith.maximumf %5, %6 : vector<128x128xf32>
    %8 = arith.truncf %7 : vector<128x128xf32> to vector<128x128xbf16>
    %c0_6 = arith.constant 0 : index
    %c0_7 = arith.constant 0 : index
    %9 = vector.load %arg5[%c0_6, %c0_7] : memref<128x8xbf16, #tpu.memory_space<vmem>>, vector<128x8xbf16>
    %cst_8 = arith.constant dense<0.000000e+00> : vector<128x8xf32>
    %10 = tpu.matmul %8, %9, %cst_8 {dimension_numbers = #tpu.dot_dimension_numbers<[1], [0], [0], [1], [0, 0, 1, 1], [], []>} : vector<128x128xbf16>, vector<128x8xbf16>, vector<128x8xf32> -> vector<128x8xf32>
    %c0_9 = arith.constant 0 : index
    %c0_10 = arith.constant 0 : index
    %11 = vector.load %arg6[%c0_9, %c0_10] : memref<1x8xf32, #tpu.memory_space<vmem>>, vector<1x8xf32>
    %12 = vector.broadcast %11 : vector<1x8xf32> to vector<128x8xf32>
    %13 = arith.addf %10, %12 : vector<128x8xf32>
    %c0_11 = arith.constant 0 : index
    %c0_12 = arith.constant 0 : index
    %14 = vector.load %arg7[%c0_11, %c0_12] : memref<128x8xbf16, #tpu.memory_space<vmem>>, vector<128x8xbf16>
    %cst_13 = arith.constant dense<0.000000e+00> : vector<128x8xf32>
    %15 = tpu.matmul %8, %14, %cst_13 {dimension_numbers = #tpu.dot_dimension_numbers<[1], [0], [0], [1], [0, 0, 1, 1], [], []>} : vector<128x128xbf16>, vector<128x8xbf16>, vector<128x8xf32> -> vector<128x8xf32>
    %c0_14 = arith.constant 0 : index
    %c0_15 = arith.constant 0 : index
    %16 = vector.load %arg8[%c0_14, %c0_15] : memref<1x8xf32, #tpu.memory_space<vmem>>, vector<1x8xf32>
    %17 = vector.broadcast %16 : vector<1x8xf32> to vector<128x8xf32>
    %18 = arith.addf %15, %17 : vector<128x8xf32>
    %cst_16 = arith.constant 5.000000e-01 : f32
    %19 = vector.broadcast %cst_16 : f32 to vector<128x8xf32>
    %20 = arith.mulf %19, %18 : vector<128x8xf32>
    %21 = math.exp %20 : vector<128x8xf32>
    %c0_17 = arith.constant 0 : index
    %c0_18 = arith.constant 0 : index
    %22 = vector.load %arg2[%c0_17, %c0_18] : memref<128x8xf32, #tpu.memory_space<vmem>>, vector<128x8xf32>
    %23 = arith.mulf %21, %22 : vector<128x8xf32>
    %24 = arith.addf %13, %23 : vector<128x8xf32>
    %25 = arith.truncf %13 : vector<128x8xf32> to vector<128x8xbf16>
    %c0_19 = arith.constant 0 : index
    %c0_20 = arith.constant 0 : index
    %26 = vector.load %arg9[%c0_19, %c0_20] : memref<8x128xbf16, #tpu.memory_space<vmem>>, vector<8x128xbf16>
    %cst_21 = arith.constant dense<0.000000e+00> : vector<128x128xf32>
    %27 = tpu.matmul %25, %26, %cst_21 {dimension_numbers = #tpu.dot_dimension_numbers<[1], [0], [0], [1], [0, 0, 1, 1], [], []>} : vector<128x8xbf16>, vector<8x128xbf16>, vector<128x128xf32> -> vector<128x128xf32>
    %c0_22 = arith.constant 0 : index
    %c0_23 = arith.constant 0 : index
    %28 = vector.load %arg10[%c0_22, %c0_23] : memref<1x128xf32, #tpu.memory_space<vmem>>, vector<1x128xf32>
    %29 = vector.broadcast %28 : vector<1x128xf32> to vector<128x128xf32>
    %30 = arith.addf %27, %29 : vector<128x128xf32>
    %cst_24 = arith.constant 0.000000e+00 : f32
    %31 = vector.broadcast %cst_24 : f32 to vector<128x128xf32>
    %32 = arith.maximumf %30, %31 : vector<128x128xf32>
    %33 = arith.truncf %32 : vector<128x128xf32> to vector<128x128xbf16>
    %c0_25 = arith.constant 0 : index
    %c0_26 = arith.constant 0 : index
    %34 = vector.load %arg11[%c0_25, %c0_26] : memref<128x32xbf16, #tpu.memory_space<vmem>>, vector<128x32xbf16>
    %cst_27 = arith.constant dense<0.000000e+00> : vector<128x32xf32>
    %35 = tpu.matmul %33, %34, %cst_27 {dimension_numbers = #tpu.dot_dimension_numbers<[1], [0], [0], [1], [0, 0, 1, 1], [], []>} : vector<128x128xbf16>, vector<128x32xbf16>, vector<128x32xf32> -> vector<128x32xf32>
    %c0_28 = arith.constant 0 : index
    %c0_29 = arith.constant 0 : index
    %36 = vector.load %arg12[%c0_28, %c0_29] : memref<1x32xf32, #tpu.memory_space<vmem>>, vector<1x32xf32>
    %37 = vector.broadcast %36 : vector<1x32xf32> to vector<128x32xf32>
    %38 = arith.addf %35, %37 : vector<128x32xf32>
    %c0_30 = arith.constant 0 : index
    %c0_31 = arith.constant 0 : index
    %39 = vector.load %arg13[%c0_30, %c0_31] : memref<128x32xf32, #tpu.memory_space<vmem>>, vector<128x32xf32>
    tpu.vector_store %arg13[%c0_30, %c0_31], %38 {strides = array<i32>} : memref<128x32xf32, #tpu.memory_space<vmem>>, vector<128x32xf32>,
    %c0_32 = arith.constant 0 : index
    %c0_33 = arith.constant 0 : index
    %40 = vector.load %arg14[%c0_32, %c0_33] : memref<128x8xf32, #tpu.memory_space<vmem>>, vector<128x8xf32>
    tpu.vector_store %arg14[%c0_32, %c0_33], %13 {strides = array<i32>} : memref<128x8xf32, #tpu.memory_space<vmem>>, vector<128x8xf32>,
    %c0_34 = arith.constant 0 : index
    %c0_35 = arith.constant 0 : index
    %41 = vector.load %arg15[%c0_34, %c0_35] : memref<128x8xf32, #tpu.memory_space<vmem>>, vector<128x8xf32>
    tpu.vector_store %arg15[%c0_34, %c0_35], %18 {strides = array<i32>} : memref<128x8xf32, #tpu.memory_space<vmem>>, vector<128x8xf32>,
    %c0_36 = arith.constant 0 : index
    %c0_37 = arith.constant 0 : index
    %42 = vector.load %arg16[%c0_36, %c0_37] : memref<128x8xf32, #tpu.memory_space<vmem>>, vector<128x8xf32>
    tpu.vector_store %arg16[%c0_36, %c0_37], %24 {strides = array<i32>} : memref<128x8xf32, #tpu.memory_space<vmem>>, vector<128x8xf32>,
    return
  }
  func.func @transform_0(%arg0: i32) -> (i32, i32) {
    %c0_i32 = arith.constant 0 : i32
    %c0_i32_0 = arith.constant 0 : i32
    return %arg0, %c0_i32 : i32, i32
  }
  func.func @transform_1(%arg0: i32) -> (i32, i32) {
    %c0_i32 = arith.constant 0 : i32
    %c0_i32_0 = arith.constant 0 : i32
    return %arg0, %c0_i32 : i32, i32
  }
  func.func @transform_2(%arg0: i32) -> (i32, i32) {
    %c0_i32 = arith.constant 0 : i32
    %c0_i32_0 = arith.constant 0 : i32
    %c0_i32_1 = arith.constant 0 : i32
    return %c0_i32, %c0_i32_0 : i32, i32
  }
  func.func @transform_3(%arg0: i32) -> (i32, i32) {
    %c0_i32 = arith.constant 0 : i32
    %c0_i32_0 = arith.constant 0 : i32
    %c0_i32_1 = arith.constant 0 : i32
    return %c0_i32, %c0_i32_0 : i32, i32
  }
  func.func @transform_4(%arg0: i32) -> (i32, i32) {
    %c0_i32 = arith.constant 0 : i32
    %c0_i32_0 = arith.constant 0 : i32
    %c0_i32_1 = arith.constant 0 : i32
    return %c0_i32, %c0_i32_0 : i32, i32
  }
  func.func @transform_5(%arg0: i32) -> (i32, i32) {
    %c0_i32 = arith.constant 0 : i32
    %c0_i32_0 = arith.constant 0 : i32
    %c0_i32_1 = arith.constant 0 : i32
    return %c0_i32, %c0_i32_0 : i32, i32
  }
  func.func @transform_6(%arg0: i32) -> (i32, i32) {
    %c0_i32 = arith.constant 0 : i32
    %c0_i32_0 = arith.constant 0 : i32
    %c0_i32_1 = arith.constant 0 : i32
    return %c0_i32, %c0_i32_0 : i32, i32
  }
  func.func @transform_7(%arg0: i32) -> (i32, i32) {
    %c0_i32 = arith.constant 0 : i32
    %c0_i32_0 = arith.constant 0 : i32
    %c0_i32_1 = arith.constant 0 : i32
    return %c0_i32, %c0_i32_0 : i32, i32
  }
  func.func @transform_8(%arg0: i32) -> (i32, i32) {
    %c0_i32 = arith.constant 0 : i32
    %c0_i32_0 = arith.constant 0 : i32
    %c0_i32_1 = arith.constant 0 : i32
    return %c0_i32, %c0_i32_0 : i32, i32
  }
  func.func @transform_9(%arg0: i32) -> (i32, i32) {
    %c0_i32 = arith.constant 0 : i32
    %c0_i32_0 = arith.constant 0 : i32
    %c0_i32_1 = arith.constant 0 : i32
    return %c0_i32, %c0_i32_0 : i32, i32
  }
  func.func @transform_10(%arg0: i32) -> (i32, i32) {
    %c0_i32 = arith.constant 0 : i32
    %c0_i32_0 = arith.constant 0 : i32
    %c0_i32_1 = arith.constant 0 : i32
    return %c0_i32, %c0_i32_0 : i32, i32
  }
  func.func @transform_11(%arg0: i32) -> (i32, i32) {
    %c0_i32 = arith.constant 0 : i32
    %c0_i32_0 = arith.constant 0 : i32
    %c0_i32_1 = arith.constant 0 : i32
    return %c0_i32, %c0_i32_0 : i32, i32
  }
  func.func @transform_12(%arg0: i32) -> (i32, i32) {
    %c0_i32 = arith.constant 0 : i32
    %c0_i32_0 = arith.constant 0 : i32
    return %arg0, %c0_i32 : i32, i32
  }
  func.func @transform_13(%arg0: i32) -> (i32, i32) {
    %c0_i32 = arith.constant 0 : i32
    %c0_i32_0 = arith.constant 0 : i32
    return %arg0, %c0_i32 : i32, i32
  }
  func.func @transform_14(%arg0: i32) -> (i32, i32) {
    %c0_i32 = arith.constant 0 : i32
    %c0_i32_0 = arith.constant 0 : i32
    return %arg0, %c0_i32 : i32, i32
  }
  func.func @transform_15(%arg0: i32) -> (i32, i32) {
    %c0_i32 = arith.constant 0 : i32
    %c0_i32_0 = arith.constant 0 : i32
    return %arg0, %c0_i32 : i32, i32
  }
}

</mosaic_0001>

<llo_original>
// kernel: tpu_custom_call.1
$region0: #{tpu_custom_call.1}
  #allocation0 [shape = 'u32[]', space=smem, size = 0x4, offset = 0x4, fixed_abs, tag = 'smem constant byte address 0x4 - core index']
  #allocation1 [shape = 'u32[144,128]{1,0:T(1,128)}', space=vmem, size = 0x12000, scoped, tag = 'internal scratch']
  %s0 = inlined_call_operand.vmem [shape: bf16[256,32], index: 0, kind: input, shape index: {}]
  %s1 = inlined_call_operand.vmem [shape: f32[256,8], index: 1, kind: input, shape index: {}]
  %s2 = inlined_call_operand.vmem [shape: bf16[32,128], index: 2, kind: input, shape index: {}]
  %s3 = inlined_call_operand.vmem [shape: f32[1,128], index: 3, kind: input, shape index: {}]
  %s4 = inlined_call_operand.vmem [shape: bf16[128,8], index: 4, kind: input, shape index: {}]
  %s5 = inlined_call_operand.vmem [shape: f32[1,8], index: 5, kind: input, shape index: {}]
  %s6 = inlined_call_operand.vmem [shape: bf16[128,8], index: 6, kind: input, shape index: {}]
  %s7 = inlined_call_operand.vmem [shape: f32[1,8], index: 7, kind: input, shape index: {}]
  %s8 = inlined_call_operand.vmem [shape: bf16[8,128], index: 8, kind: input, shape index: {}]
  %s9 = inlined_call_operand.vmem [shape: f32[1,128], index: 9, kind: input, shape index: {}]
  %s10 = inlined_call_operand.vmem [shape: bf16[128,32], index: 10, kind: input, shape index: {}]
  %s11 = inlined_call_operand.vmem [shape: f32[1,32], index: 11, kind: input, shape index: {}]
  %s12 = inlined_call_operand.vmem [shape: f32[256,32], index: 12, kind: output, shape index: {0}]
  %s13 = inlined_call_operand.vmem [shape: f32[256,8], index: 13, kind: output, shape index: {1}]
  %s14 = inlined_call_operand.vmem [shape: f32[256,8], index: 14, kind: output, shape index: {2}]
  %s15 = inlined_call_operand.vmem [shape: f32[256,8], index: 15, kind: output, shape index: {3}]
  %16 = xla_tuple %s12, %s13, %s14, %s15
  %s17 = sld [smem:[#allocation0]]
  $region105: #{tpu_custom_call.1} parent=0
    _
  %s19 = ssub.s32 1, %s17
  %s20 = scalar_select 0, %s19, %s17
  loop: start=0, step=1, limit=4
  $region2: #{tpu_custom_call.1} parent=0 // loop_pre_header
    _
  $region3: #{tpu_custom_call.1} parent=0 // loop_header
    %s22 = sphi 0, %s26
    %p23 = scmp.ge.s32.totalorder %s22, 4
    %s32 = sphi 0, %s34
    %s35 = sphi 0, %s32
    %s36 = sphi 0, %s35
    %s52 = sphi 0, %s36
    %s58 = sphi 0, %s60
    %s61 = sphi 0, %s58
    %s62 = sphi 0, %s61
    %s78 = sphi 0, %s62
    %s82 = sphi 0, %s82
    %s84 = sphi 0, %s82
    %s85 = sphi 0, %s84
    %s99 = sphi 0, %s85
    %s103 = sphi 0, %s103
    %s105 = sphi 0, %s103
    %s106 = sphi 0, %s105
    %s120 = sphi 0, %s106
    %s124 = sphi 0, %s124
    %s126 = sphi 0, %s124
    %s127 = sphi 0, %s126
    %s141 = sphi 0, %s127
    %s145 = sphi 0, %s145
    %s147 = sphi 0, %s145
    %s148 = sphi 0, %s147
    %s162 = sphi 0, %s148
    %s166 = sphi 0, %s166
    %s168 = sphi 0, %s166
    %s169 = sphi 0, %s168
    %s183 = sphi 0, %s169
    %s187 = sphi 0, %s187
    %s189 = sphi 0, %s187
    %s190 = sphi 0, %s189
    %s204 = sphi 0, %s190
    %s208 = sphi 0, %s208
    %s210 = sphi 0, %s208
    %s211 = sphi 0, %s210
    %s225 = sphi 0, %s211
    %s229 = sphi 0, %s229
    %s231 = sphi 0, %s229
    %s232 = sphi 0, %s231
    %s246 = sphi 0, %s232
    %s250 = sphi 0, %s250
    %s252 = sphi 0, %s250
    %s253 = sphi 0, %s252
    %s267 = sphi 0, %s253
    %s271 = sphi 0, %s271
    %s273 = sphi 0, %s271
    %s274 = sphi 0, %s273
    %s288 = sphi 0, %s274
    %s294 = sphi 0, %s296
    %s297 = sphi 0, %s294
    %s298 = sphi 0, %s297
    %s314 = sphi 0, %s298
    %s320 = sphi 0, %s322
    %s323 = sphi 0, %s320
    %s324 = sphi 0, %s323
    %s340 = sphi 0, %s324
    %s346 = sphi 0, %s348
    %s349 = sphi 0, %s346
    %s350 = sphi 0, %s349
    %s366 = sphi 0, %s350
    %s372 = sphi 0, %s374
    %s375 = sphi 0, %s372
    %s376 = sphi 0, %s375
    %s392 = sphi 0, %s376
  $region4: #{tpu_custom_call.1} parent=0 // loop_header_branch
    %25 = sbr.rel (%p23) target = $region8
  $region5: #{tpu_custom_call.1} parent=0 // loop_body
    %s27 = ssub.s32 %s22, 1
    %s28 = ssub.s32 %s22, 2
    %s29 = sadd.s32 %s22, 1
    %s30 = ssub.s32 %s22, %s29
    %p31 = scmp.eq.s32.totalorder %s30, 0
    %s33 = sadd.s32 %s32, 1
    %s34 = scalar_select %p31, %s32, %s33
    %p37 = pneg %p31
    %p38 = scmp.eq.s32.totalorder %s22, 1
    %p39 = por %p37, %p38
    %p40 = scmp.ne.s32.totalorder %s32, %s35
    %p41 = scmp.eq.s32.totalorder %s22, 0
    %p42 = por %p40, %p41
    %p43 = scmp.ne.s32.totalorder %s32, %s35
    %p44 = scmp.eq.s32.totalorder %s27, 1
    %p45 = por %p43, %p44
    %p46 = scmp.ne.s32.totalorder %s35, %s36
    %p47 = scmp.eq.s32.totalorder %s27, 0
    %p48 = por %p46, %p47
    %p49 = scmp.ne.s32.totalorder %s35, %s36
    %p50 = scmp.eq.s32.totalorder %s28, 1
    %p51 = por %p49, %p50
    %p53 = scmp.ne.s32.totalorder %s36, %s52
    %p54 = scmp.eq.s32.totalorder %s28, 0
    %p55 = por %p53, %p54
    %s56 = ssub.s32 %s22, %s29
    %p57 = scmp.eq.s32.totalorder %s56, 0
    %s59 = sadd.s32 %s58, 1
    %s60 = scalar_select %p57, %s58, %s59
    %p63 = pneg %p57
    %p64 = scmp.eq.s32.totalorder %s22, 1
    %p65 = por %p63, %p64
    %p66 = scmp.ne.s32.totalorder %s58, %s61
    %p67 = scmp.eq.s32.totalorder %s22, 0
    %p68 = por %p66, %p67
    %p69 = scmp.ne.s32.totalorder %s58, %s61
    %p70 = scmp.eq.s32.totalorder %s27, 1
    %p71 = por %p69, %p70
    %p72 = scmp.ne.s32.totalorder %s61, %s62
    %p73 = scmp.eq.s32.totalorder %s27, 0
    %p74 = por %p72, %p73
    %p75 = scmp.ne.s32.totalorder %s61, %s62
    %p76 = scmp.eq.s32.totalorder %s28, 1
    %p77 = por %p75, %p76
    %p79 = scmp.ne.s32.totalorder %s62, %s78
    %p80 = scmp.eq.s32.totalorder %s28, 0
    %p81 = por %p79, %p80
    %s83 = sadd.s32 %s82, 1
    %p86 = scmp.eq.s32.totalorder %s22, 1
    %p87 = scmp.ne.s32.totalorder %s82, %s84
    %p88 = scmp.eq.s32.totalorder %s22, 0
    %p89 = por %p87, %p88
    %p90 = scmp.ne.s32.totalorder %s82, %s84
    %p91 = scmp.eq.s32.totalorder %s27, 1
    %p92 = por %p90, %p91
    %p93 = scmp.ne.s32.totalorder %s84, %s85
    %p94 = scmp.eq.s32.totalorder %s27, 0
    %p95 = por %p93, %p94
    %p96 = scmp.ne.s32.totalorder %s84, %s85
    %p97 = scmp.eq.s32.totalorder %s28, 1
    %p98 = por %p96, %p97
    %p100 = scmp.ne.s32.totalorder %s85, %s99
    %p101 = scmp.eq.s32.totalorder %s28, 0
    %p102 = por %p100, %p101
    %s104 = sadd.s32 %s103, 1
    %p107 = scmp.eq.s32.totalorder %s22, 1
    %p108 = scmp.ne.s32.totalorder %s103, %s105
    %p109 = scmp.eq.s32.totalorder %s22, 0
    %p110 = por %p108, %p109
    %p111 = scmp.ne.s32.totalorder %s103, %s105
    %p112 = scmp.eq.s32.totalorder %s27, 1
    %p113 = por %p111, %p112
    %p114 = scmp.ne.s32.totalorder %s105, %s106
    %p115 = scmp.eq.s32.totalorder %s27, 0
    %p116 = por %p114, %p115
    %p117 = scmp.ne.s32.totalorder %s105, %s106
    %p118 = scmp.eq.s32.totalorder %s28, 1
    %p119 = por %p117, %p118
    %p121 = scmp.ne.s32.totalorder %s106, %s120
    %p122 = scmp.eq.s32.totalorder %s28, 0
    %p123 = por %p121, %p122
    %s125 = sadd.s32 %s124, 1
    %p128 = scmp.eq.s32.totalorder %s22, 1
    %p129 = scmp.ne.s32.totalorder %s124, %s126
    %p130 = scmp.eq.s32.totalorder %s22, 0
    %p131 = por %p129, %p130
    %p132 = scmp.ne.s32.totalorder %s124, %s126
    %p133 = scmp.eq.s32.totalorder %s27, 1
    %p134 = por %p132, %p133
    %p135 = scmp.ne.s32.totalorder %s126, %s127
    %p136 = scmp.eq.s32.totalorder %s27, 0
    %p137 = por %p135, %p136
    %p138 = scmp.ne.s32.totalorder %s126, %s127
    %p139 = scmp.eq.s32.totalorder %s28, 1
    %p140 = por %p138, %p139
    %p142 = scmp.ne.s32.totalorder %s127, %s141
    %p143 = scmp.eq.s32.totalorder %s28, 0
    %p144 = por %p142, %p143
    %s146 = sadd.s32 %s145, 1
    %p149 = scmp.eq.s32.totalorder %s22, 1
    %p150 = scmp.ne.s32.totalorder %s145, %s147
    %p151 = scmp.eq.s32.totalorder %s22, 0
    %p152 = por %p150, %p151
    %p153 = scmp.ne.s32.totalorder %s145, %s147
    %p154 = scmp.eq.s32.totalorder %s27, 1
    %p155 = por %p153, %p154
    %p156 = scmp.ne.s32.totalorder %s147, %s148
    %p157 = scmp.eq.s32.totalorder %s27, 0
    %p158 = por %p156, %p157
    %p159 = scmp.ne.s32.totalorder %s147, %s148
    %p160 = scmp.eq.s32.totalorder %s28, 1
    %p161 = por %p159, %p160
    %p163 = scmp.ne.s32.totalorder %s148, %s162
    %p164 = scmp.eq.s32.totalorder %s28, 0
    %p165 = por %p163, %p164
    %s167 = sadd.s32 %s166, 1
    %p170 = scmp.eq.s32.totalorder %s22, 1
    %p171 = scmp.ne.s32.totalorder %s166, %s168
    %p172 = scmp.eq.s32.totalorder %s22, 0
    %p173 = por %p171, %p172
    %p174 = scmp.ne.s32.totalorder %s166, %s168
    %p175 = scmp.eq.s32.totalorder %s27, 1
    %p176 = por %p174, %p175
    %p177 = scmp.ne.s32.totalorder %s168, %s169
    %p178 = scmp.eq.s32.totalorder %s27, 0
    %p179 = por %p177, %p178
    %p180 = scmp.ne.s32.totalorder %s168, %s169
    %p181 = scmp.eq.s32.totalorder %s28, 1
    %p182 = por %p180, %p181
    %p184 = scmp.ne.s32.totalorder %s169, %s183
    %p185 = scmp.eq.s32.totalorder %s28, 0
    %p186 = por %p184, %p185
    %s188 = sadd.s32 %s187, 1
    %p191 = scmp.eq.s32.totalorder %s22, 1
    %p192 = scmp.ne.s32.totalorder %s187, %s189
    %p193 = scmp.eq.s32.totalorder %s22, 0
    %p194 = por %p192, %p193
    %p195 = scmp.ne.s32.totalorder %s187, %s189
    %p196 = scmp.eq.s32.totalorder %s27, 1
    %p197 = por %p195, %p196
    %p198 = scmp.ne.s32.totalorder %s189, %s190
    %p199 = scmp.eq.s32.totalorder %s27, 0
    %p200 = por %p198, %p199
    %p201 = scmp.ne.s32.totalorder %s189, %s190
    %p202 = scmp.eq.s32.totalorder %s28, 1
    %p203 = por %p201, %p202
    %p205 = scmp.ne.s32.totalorder %s190, %s204
    %p206 = scmp.eq.s32.totalorder %s28, 0
    %p207 = por %p205, %p206
    %s209 = sadd.s32 %s208, 1
    %p212 = scmp.eq.s32.totalorder %s22, 1
    %p213 = scmp.ne.s32.totalorder %s208, %s210
    %p214 = scmp.eq.s32.totalorder %s22, 0
    %p215 = por %p213, %p214
    %p216 = scmp.ne.s32.totalorder %s208, %s210
    %p217 = scmp.eq.s32.totalorder %s27, 1
    %p218 = por %p216, %p217
    %p219 = scmp.ne.s32.totalorder %s210, %s211
    %p220 = scmp.eq.s32.totalorder %s27, 0
    %p221 = por %p219, %p220
    %p222 = scmp.ne.s32.totalorder %s210, %s211
    %p223 = scmp.eq.s32.totalorder %s28, 1
    %p224 = por %p222, %p223
    %p226 = scmp.ne.s32.totalorder %s211, %s225
    %p227 = scmp.eq.s32.totalorder %s28, 0
    %p228 = por %p226, %p227
    %s230 = sadd.s32 %s229, 1
    %p233 = scmp.eq.s32.totalorder %s22, 1
    %p234 = scmp.ne.s32.totalorder %s229, %s231
    %p235 = scmp.eq.s32.totalorder %s22, 0
    %p236 = por %p234, %p235
    %p237 = scmp.ne.s32.totalorder %s229, %s231
    %p238 = scmp.eq.s32.totalorder %s27, 1
    %p239 = por %p237, %p238
    %p240 = scmp.ne.s32.totalorder %s231, %s232
    %p241 = scmp.eq.s32.totalorder %s27, 0
    %p242 = por %p240, %p241
    %p243 = scmp.ne.s32.totalorder %s231, %s232
    %p244 = scmp.eq.s32.totalorder %s28, 1
    %p245 = por %p243, %p244
    %p247 = scmp.ne.s32.totalorder %s232, %s246
    %p248 = scmp.eq.s32.totalorder %s28, 0
    %p249 = por %p247, %p248
    %s251 = sadd.s32 %s250, 1
    %p254 = scmp.eq.s32.totalorder %s22, 1
    %p255 = scmp.ne.s32.totalorder %s250, %s252
    %p256 = scmp.eq.s32.totalorder %s22, 0
    %p257 = por %p255, %p256
    %p258 = scmp.ne.s32.totalorder %s250, %s252
    %p259 = scmp.eq.s32.totalorder %s27, 1
    %p260 = por %p258, %p259
    %p261 = scmp.ne.s32.totalorder %s252, %s253
    %p262 = scmp.eq.s32.totalorder %s27, 0
    %p263 = por %p261, %p262
    %p264 = scmp.ne.s32.totalorder %s252, %s253
    %p265 = scmp.eq.s32.totalorder %s28, 1
    %p266 = por %p264, %p265
    %p268 = scmp.ne.s32.totalorder %s253, %s267
    %p269 = scmp.eq.s32.totalorder %s28, 0
    %p270 = por %p268, %p269
    %s272 = sadd.s32 %s271, 1
    %p275 = scmp.eq.s32.totalorder %s22, 1
    %p276 = scmp.ne.s32.totalorder %s271, %s273
    %p277 = scmp.eq.s32.totalorder %s22, 0
    %p278 = por %p276, %p277
    %p279 = scmp.ne.s32.totalorder %s271, %s273
    %p280 = scmp.eq.s32.totalorder %s27, 1
    %p281 = por %p279, %p280
    %p282 = scmp.ne.s32.totalorder %s273, %s274
    %p283 = scmp.eq.s32.totalorder %s27, 0
    %p284 = por %p282, %p283
    %p285 = scmp.ne.s32.totalorder %s273, %s274
    %p286 = scmp.eq.s32.totalorder %s28, 1
    %p287 = por %p285, %p286
    %p289 = scmp.ne.s32.totalorder %s274, %s288
    %p290 = scmp.eq.s32.totalorder %s28, 0
    %p291 = por %p289, %p290
    %s292 = ssub.s32 %s22, %s29
    %p293 = scmp.eq.s32.totalorder %s292, 0
    %s295 = sadd.s32 %s294, 1
    %s296 = scalar_select %p293, %s294, %s295
    %p299 = pneg %p293
    %p300 = scmp.eq.s32.totalorder %s22, 1
    %p301 = por %p299, %p300
    %p302 = scmp.ne.s32.totalorder %s294, %s297
    %p303 = scmp.eq.s32.totalorder %s22, 0
    %p304 = por %p302, %p303
    %p305 = scmp.ne.s32.totalorder %s294, %s297
    %p306 = scmp.eq.s32.totalorder %s27, 1
    %p307 = por %p305, %p306
    %p308 = scmp.ne.s32.totalorder %s297, %s298
    %p309 = scmp.eq.s32.totalorder %s27, 0
    %p310 = por %p308, %p309
    %p311 = scmp.ne.s32.totalorder %s297, %s298
    %p312 = scmp.eq.s32.totalorder %s28, 1
    %p313 = por %p311, %p312
    %p315 = scmp.ne.s32.totalorder %s298, %s314
    %p316 = scmp.eq.s32.totalorder %s28, 0
    %p317 = por %p315, %p316
    %s318 = ssub.s32 %s22, %s29
    %p319 = scmp.eq.s32.totalorder %s318, 0
    %s321 = sadd.s32 %s320, 1
    %s322 = scalar_select %p319, %s320, %s321
    %p325 = pneg %p319
    %p326 = scmp.eq.s32.totalorder %s22, 1
    %p327 = por %p325, %p326
    %p328 = scmp.ne.s32.totalorder %s320, %s323
    %p329 = scmp.eq.s32.totalorder %s22, 0
    %p330 = por %p328, %p329
    %p331 = scmp.ne.s32.totalorder %s320, %s323
    %p332 = scmp.eq.s32.totalorder %s27, 1
    %p333 = por %p331, %p332
    %p334 = scmp.ne.s32.totalorder %s323, %s324
    %p335 = scmp.eq.s32.totalorder %s27, 0
    %p336 = por %p334, %p335
    %p337 = scmp.ne.s32.totalorder %s323, %s324
    %p338 = scmp.eq.s32.totalorder %s28, 1
    %p339 = por %p337, %p338
    %p341 = scmp.ne.s32.totalorder %s324, %s340
    %p342 = scmp.eq.s32.totalorder %s28, 0
    %p343 = por %p341, %p342
    %s344 = ssub.s32 %s22, %s29
    %p345 = scmp.eq.s32.totalorder %s344, 0
    %s347 = sadd.s32 %s346, 1
    %s348 = scalar_select %p345, %s346, %s347
    %p351 = pneg %p345
    %p352 = scmp.eq.s32.totalorder %s22, 1
    %p353 = por %p351, %p352
    %p354 = scmp.ne.s32.totalorder %s346, %s349
    %p355 = scmp.eq.s32.totalorder %s22, 0
    %p356 = por %p354, %p355
    %p357 = scmp.ne.s32.totalorder %s346, %s349
    %p358 = scmp.eq.s32.totalorder %s27, 1
    %p359 = por %p357, %p358
    %p360 = scmp.ne.s32.totalorder %s349, %s350
    %p361 = scmp.eq.s32.totalorder %s27, 0
    %p362 = por %p360, %p361
    %p363 = scmp.ne.s32.totalorder %s349, %s350
    %p364 = scmp.eq.s32.totalorder %s28, 1
    %p365 = por %p363, %p364
    %p367 = scmp.ne.s32.totalorder %s350, %s366
    %p368 = scmp.eq.s32.totalorder %s28, 0
    %p369 = por %p367, %p368
    %s370 = ssub.s32 %s22, %s29
    %p371 = scmp.eq.s32.totalorder %s370, 0
    %s373 = sadd.s32 %s372, 1
    %s374 = scalar_select %p371, %s372, %s373
    %p377 = pneg %p371
    %p378 = scmp.eq.s32.totalorder %s22, 1
    %p379 = por %p377, %p378
    %p380 = scmp.ne.s32.totalorder %s372, %s375
    %p381 = scmp.eq.s32.totalorder %s22, 0
    %p382 = por %p380, %p381
    %p383 = scmp.ne.s32.totalorder %s372, %s375
    %p384 = scmp.eq.s32.totalorder %s27, 1
    %p385 = por %p383, %p384
    %p386 = scmp.ne.s32.totalorder %s375, %s376
    %p387 = scmp.eq.s32.totalorder %s27, 0
    %p388 = por %p386, %p387
    %p389 = scmp.ne.s32.totalorder %s375, %s376
    %p390 = scmp.eq.s32.totalorder %s28, 1
    %p391 = por %p389, %p390
    %p393 = scmp.ne.s32.totalorder %s376, %s392
    %p394 = scmp.eq.s32.totalorder %s28, 0
    %p395 = por %p393, %p394
    %p396 = scmp.le.s32.totalorder 1, %s22
    %p397 = scmp.lt.s32.totalorder %s22, 3
    %p398 = pnand %p396, %p397
    %p399 = pneg %p398
    // Predicated region
    $region9: #{tpu_custom_call.1} parent=5 // pred_check
      _
    $region10: #{tpu_custom_call.1} parent=5 // pred_check_branch
      %401 = sbr.rel (%p398) target = $region12
    $region11: #{tpu_custom_call.1} parent=5 // pred_region
      %s402 = ssub.s32 %s22, 1
      // Predicated region
      $region13: #{tpu_custom_call.1} parent=11 // pred_check
        %p403 = pneg %p95
      $region14: #{tpu_custom_call.1} parent=11 // pred_check_branch
        %405 = sbr.rel (%p403) target = $region16
      $region15: #{tpu_custom_call.1} parent=11 // pred_region
        _
      $region16: #{tpu_custom_call.1} parent=11 // pred_fallthru
        _
      // Predicated region
      $region17: #{tpu_custom_call.1} parent=11 // pred_check
        %p406 = pneg %p116
      $region18: #{tpu_custom_call.1} parent=11 // pred_check_branch
        %408 = sbr.rel (%p406) target = $region20
      $region19: #{tpu_custom_call.1} parent=11 // pred_region
        _
      $region20: #{tpu_custom_call.1} parent=11 // pred_fallthru
        _
      // Predicated region
      $region21: #{tpu_custom_call.1} parent=11 // pred_check
        %p409 = pneg %p137
      $region22: #{tpu_custom_call.1} parent=11 // pred_check_branch
        %411 = sbr.rel (%p409) target = $region24
      $region23: #{tpu_custom_call.1} parent=11 // pred_region
        _
      $region24: #{tpu_custom_call.1} parent=11 // pred_fallthru
        _
      // Predicated region
      $region25: #{tpu_custom_call.1} parent=11 // pred_check
        %p412 = pneg %p158
      $region26: #{tpu_custom_call.1} parent=11 // pred_check_branch
        %414 = sbr.rel (%p412) target = $region28
      $region27: #{tpu_custom_call.1} parent=11 // pred_region
        _
      $region28: #{tpu_custom_call.1} parent=11 // pred_fallthru
        _
      // Predicated region
      $region29: #{tpu_custom_call.1} parent=11 // pred_check
        %p415 = pneg %p179
      $region30: #{tpu_custom_call.1} parent=11 // pred_check_branch
        %417 = sbr.rel (%p415) target = $region32
      $region31: #{tpu_custom_call.1} parent=11 // pred_region
        _
      $region32: #{tpu_custom_call.1} parent=11 // pred_fallthru
        _
      // Predicated region
      $region33: #{tpu_custom_call.1} parent=11 // pred_check
        %p418 = pneg %p200
      $region34: #{tpu_custom_call.1} parent=11 // pred_check_branch
        %420 = sbr.rel (%p418) target = $region36
      $region35: #{tpu_custom_call.1} parent=11 // pred_region
        _
      $region36: #{tpu_custom_call.1} parent=11 // pred_fallthru
        _
      // Predicated region
      $region37: #{tpu_custom_call.1} parent=11 // pred_check
        %p421 = pneg %p221
      $region38: #{tpu_custom_call.1} parent=11 // pred_check_branch
        %423 = sbr.rel (%p421) target = $region40
      $region39: #{tpu_custom_call.1} parent=11 // pred_region
        _
      $region40: #{tpu_custom_call.1} parent=11 // pred_fallthru
        _
      // Predicated region
      $region41: #{tpu_custom_call.1} parent=11 // pred_check
        %p424 = pneg %p242
      $region42: #{tpu_custom_call.1} parent=11 // pred_check_branch
        %426 = sbr.rel (%p424) target = $region44
      $region43: #{tpu_custom_call.1} parent=11 // pred_region
        _
      $region44: #{tpu_custom_call.1} parent=11 // pred_fallthru
        _
      // Predicated region
      $region45: #{tpu_custom_call.1} parent=11 // pred_check
        %p427 = pneg %p263
      $region46: #{tpu_custom_call.1} parent=11 // pred_check_branch
        %429 = sbr.rel (%p427) target = $region48
      $region47: #{tpu_custom_call.1} parent=11 // pred_region
        _
      $region48: #{tpu_custom_call.1} parent=11 // pred_fallthru
        _
      // Predicated region
      $region49: #{tpu_custom_call.1} parent=11 // pred_check
        %p430 = pneg %p284
      $region50: #{tpu_custom_call.1} parent=11 // pred_check_branch
        %432 = sbr.rel (%p430) target = $region52
      $region51: #{tpu_custom_call.1} parent=11 // pred_region
        _
      $region52: #{tpu_custom_call.1} parent=11 // pred_fallthru
        _
    $region12: #{tpu_custom_call.1} parent=5 // pred_fallthru
      _
    %p433 = scmp.lt.s32.totalorder %s22, 2
    // Predicated region
    $region53: #{tpu_custom_call.1} parent=5 // pred_check
      %p434 = pneg %p433
    $region54: #{tpu_custom_call.1} parent=5 // pred_check_branch
      %436 = sbr.rel (%p434) target = $region56
    $region55: #{tpu_custom_call.1} parent=5 // pred_region
      // Predicated region
      $region57: #{tpu_custom_call.1} parent=55 // pred_check
        %p437 = pneg %p42
      $region58: #{tpu_custom_call.1} parent=55 // pred_check_branch
        %439 = sbr.rel (%p437) target = $region60
      $region59: #{tpu_custom_call.1} parent=55 // pred_region
        %s440 = smul.u32 16, %s22
        %p441 = scmp.lt.s32.totalorder %s440, 31
        %s442 = scalar_select %p441, %s440, 31
        %s443 = smul.addr %s442, 4
        %s444 = scalar_lea.vmem %s0, %s443
        %s445 = smul.u32 16, %s22
      $region60: #{tpu_custom_call.1} parent=55 // pred_fallthru
        _
      // Predicated region
      $region61: #{tpu_custom_call.1} parent=55 // pred_check
        %p446 = pneg %p68
      $region62: #{tpu_custom_call.1} parent=55 // pred_check_branch
        %448 = sbr.rel (%p446) target = $region64
      $region63: #{tpu_custom_call.1} parent=55 // pred_region
        %s449 = smul.u32 16, %s22
        %p450 = scmp.lt.s32.totalorder %s449, 31
        %s451 = scalar_select %p450, %s449, 31
        %s452 = smul.addr %s451, 8
        %s453 = scalar_lea.vmem %s1, %s452
        %s454 = smul.u32 16, %s22
      $region64: #{tpu_custom_call.1} parent=55 // pred_fallthru
        _
    $region56: #{tpu_custom_call.1} parent=5 // pred_fallthru
      _
    %p455 = scmp.le.s32.totalorder 1, %s22
    %p456 = scmp.lt.s32.totalorder %s22, 3
    %p457 = pnand %p455, %p456
    %p458 = pneg %p457
    // Predicated region
    $region65: #{tpu_custom_call.1} parent=5 // pred_check
      _
    $region66: #{tpu_custom_call.1} parent=5 // pred_check_branch
      %460 = sbr.rel (%p457) target = $region68
    $region67: #{tpu_custom_call.1} parent=5 // pred_region
      %s461 = ssub.s32 %s22, 1
      %s462 = smul.u32 16, %s27
      %p463 = scmp.lt.s32.totalorder %s462, 31
      %s464 = scalar_select %p463, %s462, 31
      %s465 = smul.addr %s464, 4
      %s466 = scalar_lea.vmem %s0, %s465
      %p467 = pneg %p48
      %p468 = pneg %p45
      %s469 = smul.u32 16, %s27
      %p470 = scmp.lt.s32.totalorder %s469, 31
      %s471 = scalar_select %p470, %s469, 31
      %s472 = smul.addr %s471, 8
      %s473 = scalar_lea.vmem %s1, %s472
      %p474 = pneg %p74
      %p475 = pneg %p71
      %p476 = pneg %p95
      %p477 = pneg %p92
      %p478 = pneg %p116
      %p479 = pneg %p113
      %p480 = pneg %p137
      %p481 = pneg %p134
      %p482 = pneg %p158
      %p483 = pneg %p155
      %p484 = pneg %p179
      %p485 = pneg %p176
      %p486 = pneg %p200
      %p487 = pneg %p197
      %p488 = pneg %p221
      %p489 = pneg %p218
      %p490 = pneg %p242
      %p491 = pneg %p239
      %p492 = pneg %p263
      %p493 = pneg %p260
      %p494 = pneg %p284
      %p495 = pneg %p281
      %p496 = pneg %p310
      %p497 = pneg %p307
      %s498 = smul.u32 16, %s27
      %p499 = scmp.lt.s32.totalorder %s498, 31
      %s500 = scalar_select %p499, %s498, 31
      %s501 = smul.addr %s500, 8
      %s502 = scalar_lea.vmem %s12, %s501
      %p503 = pneg %p336
      %p504 = pneg %p333
      %s505 = smul.u32 16, %s27
      %p506 = scmp.lt.s32.totalorder %s505, 31
      %s507 = scalar_select %p506, %s505, 31
      %s508 = smul.addr %s507, 8
      %s509 = scalar_lea.vmem %s13, %s508
      %p510 = pneg %p362
      %p511 = pneg %p359
      %s512 = smul.u32 16, %s27
      %p513 = scmp.lt.s32.totalorder %s512, 31
      %s514 = scalar_select %p513, %s512, 31
      %s515 = smul.addr %s514, 8
      %s516 = scalar_lea.vmem %s14, %s515
      %p517 = pneg %p388
      %p518 = pneg %p385
      %s519 = smul.u32 16, %s27
      %p520 = scmp.lt.s32.totalorder %s519, 31
      %s521 = scalar_select %p520, %s519, 31
      %s522 = smul.addr %s521, 8
      %s523 = scalar_lea.vmem %s15, %s522
      %s524 = smul.u32 16, %s27
      %p525 = scmp.lt.s32.totalorder %s524, 31
      %s526 = scalar_select %p525, %s524, 31
      %s527 = smul.addr %s526, 4
      %s528 = scalar_lea.vmem %s0, %s527
      %s529 = smul.u32 16, %s27
      %s530 = smul.u32 16, %s27
      %p531 = scmp.lt.s32.totalorder %s530, 31
      %s532 = scalar_select %p531, %s530, 31
      %s533 = smul.addr %s532, 8
      %s534 = scalar_lea.vmem %s1, %s533
      %s535 = smul.u32 16, %s27
      %s536 = smul.u32 16, %s27
      %p537 = scmp.lt.s32.totalorder %s536, 31
      %s538 = scalar_select %p537, %s536, 31
      %s539 = smul.addr %s538, 8
      %s540 = scalar_lea.vmem %s12, %s539
      %s541 = smul.u32 16, %s27
      %s542 = smul.u32 16, %s27
      %p543 = scmp.lt.s32.totalorder %s542, 31
      %s544 = scalar_select %p543, %s542, 31
      %s545 = smul.addr %s544, 8
      %s546 = scalar_lea.vmem %s13, %s545
      %s547 = smul.u32 16, %s27
      %s548 = smul.u32 16, %s27
      %p549 = scmp.lt.s32.totalorder %s548, 31
      %s550 = scalar_select %p549, %s548, 31
      %s551 = smul.addr %s550, 8
      %s552 = scalar_lea.vmem %s14, %s551
      %s553 = smul.u32 16, %s27
      %s554 = smul.u32 16, %s27
      %p555 = scmp.lt.s32.totalorder %s554, 31
      %s556 = scalar_select %p555, %s554, 31
      %s557 = smul.addr %s556, 8
      %s558 = scalar_lea.vmem %s15, %s557
      %s559 = smul.u32 16, %s27
      %v561 = vld [vmem:[%s528] sm:$0xf]
      %v562 = vld [vmem:[%s528 + $0x4] sm:$0xf]
      %v563 = vld [vmem:[%s528 + $0x8] sm:$0xf]
      %v564 = vld [vmem:[%s528 + $0xc] sm:$0xf]
      %v565 = vld [vmem:[%s528 + $0x10] sm:$0xf]
      %v566 = vld [vmem:[%s528 + $0x14] sm:$0xf]
      %v567 = vld [vmem:[%s528 + $0x18] sm:$0xf]
      %v568 = vld [vmem:[%s528 + $0x1c] sm:$0xf]
      %v569 = vld [vmem:[%s528 + $0x20] sm:$0xf]
      %v570 = vld [vmem:[%s528 + $0x24] sm:$0xf]
      %v571 = vld [vmem:[%s528 + $0x28] sm:$0xf]
      %v572 = vld [vmem:[%s528 + $0x2c] sm:$0xf]
      %v573 = vld [vmem:[%s528 + $0x30] sm:$0xf]
      %v574 = vld [vmem:[%s528 + $0x34] sm:$0xf]
      %v575 = vld [vmem:[%s528 + $0x38] sm:$0xf]
      %v576 = vld [vmem:[%s528 + $0x3c] sm:$0xf]
      %v577 = vld [vmem:[%s2] sm:$0xf]
      %v578 = vld [vmem:[%s2 + $0x4] sm:$0xf]
      %v579 = vld [vmem:[%s2 + $0x8] sm:$0xf]
      %v580 = vld [vmem:[%s2 + $0xc] sm:$0xf]
      %v581 = vld [vmem:[%s3] sm:$0x1]
      %v583 = vlaneseq
      %v584 = vshrl.u32 %v583, 7
      %v585 = vsub.s32 0, %v584
      %v586 = vrot.slane %v581, %v585
      %v604 = vunpack.c.l.b16 %v561
      %v605 = vunpack.c.l.b16 %v562
      %v606 = vunpack.c.l.b16 %v563
      %v607 = vunpack.c.l.b16 %v564
      %v608 = vunpack.c.l.b16 %v565
      %v609 = vunpack.c.l.b16 %v566
      %v610 = vunpack.c.l.b16 %v567
      %v611 = vunpack.c.l.b16 %v568
      %v612 = vunpack.c.l.b16 %v569
      %v613 = vunpack.c.l.b16 %v570
      %v614 = vunpack.c.l.b16 %v571
      %v615 = vunpack.c.l.b16 %v572
      %v616 = vunpack.c.l.b16 %v573
      %v617 = vunpack.c.l.b16 %v574
      %v618 = vunpack.c.l.b16 %v575
      %v619 = vunpack.c.l.b16 %v576
      %v620 = vpack.c.b16 %v605, %v604
      %v621 = vpack.c.b16 %v607, %v606
      %v622 = vpack.c.b16 %v609, %v608
      %v623 = vpack.c.b16 %v611, %v610
      %v624 = vpack.c.b16 %v613, %v612
      %v625 = vpack.c.b16 %v615, %v614
      %v626 = vpack.c.b16 %v617, %v616
      %v627 = vpack.c.b16 %v619, %v618
      %v632 = vunpack.c.l.b16 %v577
      %v633 = vunpack.c.l.b16 %v578
      %v634 = vunpack.c.l.b16 %v579
      %v635 = vunpack.c.l.b16 %v580
      %v636 = vpack.c.b16 %v633, %v632
      %v637 = vpack.c.b16 %v635, %v634
      %vm640 = vcmask 261120
      %v642 = vsel %vm640, %v620, 0
      %v645 = vsel %vm640, %v621, 0
      %v648 = vsel %vm640, %v622, 0
      %v651 = vsel %vm640, %v623, 0
      %v654 = vsel %vm640, %v624, 0
      %v657 = vsel %vm640, %v625, 0
      %v660 = vsel %vm640, %v626, 0
      %v663 = vsel %vm640, %v627, 0
      %665 = vmatprep.subr.bf16.mxu0 0
      %666 = vmatpush1.bf16.msra.mxu0 %v636
      %667 = vmatprep.subr.bf16.mxu0 0
      %668 = vmatpush1.bf16.msra.mxu0 %v637
      %669 = vmatprep.subr.bf16.mxu0 0
      %670 = vmatpush1.bf16.msra.mxu0 0
      %671 = vmatprep.subr.bf16.mxu0 0
      %672 = vmatpush1.bf16.msra.mxu0 0
      %673 = vmatprep.subr.bf16.mxu0 0
      %674 = vmatpush1.bf16.msra.mxu0 0
      %675 = vmatprep.subr.bf16.mxu0 0
      %676 = vmatpush1.bf16.msra.mxu0 0
      %677 = vmatprep.subr.bf16.mxu0 0
      %678 = vmatpush1.bf16.msra.mxu0 0
      %679 = vmatprep.subr.bf16.mxu0 0
      %680 = vmatpush1.bf16.msra.mxu0 0
      %681 = vmatprep.subr.bf16.mxu0 0
      %682 = vmatpush1.bf16.msra.mxu0 0
      %683 = vmatprep.subr.bf16.mxu0 0
      %684 = vmatpush1.bf16.msra.mxu0 0
      %685 = vmatprep.subr.bf16.mxu0 0
      %686 = vmatpush1.bf16.msra.mxu0 0
      %687 = vmatprep.subr.bf16.mxu0 0
      %688 = vmatpush1.bf16.msra.mxu0 0
      %689 = vmatprep.subr.bf16.mxu0 0
      %690 = vmatpush1.bf16.msra.mxu0 0
      %691 = vmatprep.subr.bf16.mxu0 0
      %692 = vmatpush1.bf16.msra.mxu0 0
      %693 = vmatprep.subr.bf16.mxu0 0
      %694 = vmatpush1.bf16.msra.mxu0 0
      %695 = vmatprep.subr.bf16.mxu0 0
      %696 = vmatpush1.bf16.msra.mxu0 0
      %697 = vmatprep.mubr.bf16.mxu0 0
      %698 = vmatmul.mubr.bf16.gmra.mrb[0].mxu0 %v642
      %v699 = vpop.f32.mrb[0].mxu0
      %v700 = vadd.f32 %v586, %v699
      %v701 = vpop.f32.mrb[0].mxu0
      %v702 = vpop.f32.mrb[0].mxu0
      %v703 = vadd.f32 %v586, %v702
      %v704 = vpop.f32.mrb[0].mxu0
      %705 = vmatprep.mubr.bf16.mxu0 0
      %706 = vmatmul.mubr.bf16.gmra.mrb[0].mxu0 %v645
      %v707 = vpop.f32.mrb[0].mxu0
      %v708 = vadd.f32 %v586, %v707
      %v709 = vpop.f32.mrb[0].mxu0
      %v710 = vpop.f32.mrb[0].mxu0
      %v711 = vadd.f32 %v586, %v710
      %v712 = vpop.f32.mrb[0].mxu0
      %713 = vmatprep.mubr.bf16.mxu0 0
      %714 = vmatmul.mubr.bf16.gmra.mrb[0].mxu0 %v648
      %v715 = vpop.f32.mrb[0].mxu0
      %v716 = vadd.f32 %v586, %v715
      %v717 = vpop.f32.mrb[0].mxu0
      %v718 = vpop.f32.mrb[0].mxu0
      %v719 = vadd.f32 %v586, %v718
      %v720 = vpop.f32.mrb[0].mxu0
      %721 = vmatprep.mubr.bf16.mxu0 0
      %722 = vmatmul.mubr.bf16.gmra.mrb[0].mxu0 %v651
      %v723 = vpop.f32.mrb[0].mxu0
      %v724 = vadd.f32 %v586, %v723
      %v725 = vpop.f32.mrb[0].mxu0
      %v726 = vpop.f32.mrb[0].mxu0
      %v727 = vadd.f32 %v586, %v726
      %v728 = vpop.f32.mrb[0].mxu0
      %729 = vmatprep.mubr.bf16.mxu0 0
      %730 = vmatmul.mubr.bf16.gmra.mrb[0].mxu0 %v654
      %v731 = vpop.f32.mrb[0].mxu0
      %v732 = vadd.f32 %v586, %v731
      %v733 = vpop.f32.mrb[0].mxu0
      %v734 = vpop.f32.mrb[0].mxu0
      %v735 = vadd.f32 %v586, %v734
      %v736 = vpop.f32.mrb[0].mxu0
      %737 = vmatprep.mubr.bf16.mxu0 0
      %738 = vmatmul.mubr.bf16.gmra.mrb[0].mxu0 %v657
      %v739 = vpop.f32.mrb[0].mxu0
      %v740 = vadd.f32 %v586, %v739
      %v741 = vpop.f32.mrb[0].mxu0
      %v742 = vpop.f32.mrb[0].mxu0
      %v743 = vadd.f32 %v586, %v742
      %v744 = vpop.f32.mrb[0].mxu0
      %745 = vmatprep.mubr.bf16.mxu0 0
      %746 = vmatmul.mubr.bf16.gmra.mrb[0].mxu0 %v660
      %v747 = vpop.f32.mrb[0].mxu0
      %v748 = vadd.f32 %v586, %v747
      %v749 = vpop.f32.mrb[0].mxu0
      %v750 = vpop.f32.mrb[0].mxu0
      %v751 = vadd.f32 %v586, %v750
      %v752 = vpop.f32.mrb[0].mxu0
      %753 = vmatprep.mubr.bf16.mxu0 0
      %754 = vmatmul.mubr.bf16.gmra.mrb[0].mxu0 %v663
      %v755 = vpop.f32.mrb[0].mxu0
      %v756 = vadd.f32 %v586, %v755
      %v757 = vpop.f32.mrb[0].mxu0
      %v758 = vpop.f32.mrb[0].mxu0
      %v759 = vadd.f32 %v586, %v758
      %v760 = vpop.f32.mrb[0].mxu0
      %761 = vdwg.mxu0
      %v762 = vmax.f32 %v700, 0.0
      %v763 = vmax.f32 %v703, 0.0
      %v764 = vmax.f32 %v708, 0.0
      %v765 = vmax.f32 %v711, 0.0
      %v766 = vmax.f32 %v716, 0.0
      %v767 = vmax.f32 %v719, 0.0
      %v768 = vmax.f32 %v724, 0.0
      %v769 = vmax.f32 %v727, 0.0
      %v770 = vmax.f32 %v732, 0.0
      %v771 = vmax.f32 %v735, 0.0
      %v772 = vmax.f32 %v740, 0.0
      %v773 = vmax.f32 %v743, 0.0
      %v774 = vmax.f32 %v748, 0.0
      %v775 = vmax.f32 %v751, 0.0
      %v776 = vmax.f32 %v756, 0.0
      %v777 = vmax.f32 %v759, 0.0
      %v778 = vpack.c.bf16 %v763, %v762
      %v779 = vpack.c.bf16 %v765, %v764
      %v780 = vpack.c.bf16 %v767, %v766
      %v781 = vpack.c.bf16 %v769, %v768
      %v782 = vpack.c.bf16 %v771, %v770
      %v783 = vpack.c.bf16 %v773, %v772
      %v784 = vpack.c.bf16 %v775, %v774
      %v785 = vpack.c.bf16 %v777, %v776
      %v786 = vld [vmem:[%s4] sm:$0xf]
      %v787 = vld [vmem:[%s4 + $0x4] sm:$0xf]
      %v788 = vld [vmem:[%s4 + $0x8] sm:$0xf]
      %v789 = vld [vmem:[%s4 + $0xc] sm:$0xf]
      %v790 = vld [vmem:[%s4 + $0x10] sm:$0xf]
      %v791 = vld [vmem:[%s4 + $0x14] sm:$0xf]
      %v792 = vld [vmem:[%s4 + $0x18] sm:$0xf]
      %v793 = vld [vmem:[%s4 + $0x1c] sm:$0xf]
      %v794 = vld [vmem:[%s4 + $0x20] sm:$0xf]
      %v795 = vld [vmem:[%s4 + $0x24] sm:$0xf]
      %v796 = vld [vmem:[%s4 + $0x28] sm:$0xf]
      %v797 = vld [vmem:[%s4 + $0x2c] sm:$0xf]
      %v798 = vld [vmem:[%s4 + $0x30] sm:$0xf]
      %v799 = vld [vmem:[%s4 + $0x34] sm:$0xf]
      %v800 = vld [vmem:[%s4 + $0x38] sm:$0xf]
      %v801 = vld [vmem:[%s4 + $0x3c] sm:$0xf]
      %v802 = vld [vmem:[%s5] sm:$0x1]
      %v804 = vlaneseq
      %v805 = vshrl.u32 %v804, 7
      %v806 = vsub.s32 0, %v805
      %v807 = vrot.slane %v802, %v806
      %v825 = vunpack.c.l.b16 %v786
      %v826 = vunpack.c.l.b16 %v787
      %v827 = vunpack.c.l.b16 %v788
      %v828 = vunpack.c.l.b16 %v789
      %v829 = vunpack.c.l.b16 %v790
      %v830 = vunpack.c.l.b16 %v791
      %v831 = vunpack.c.l.b16 %v792
      %v832 = vunpack.c.l.b16 %v793
      %v833 = vunpack.c.l.b16 %v794
      %v834 = vunpack.c.l.b16 %v795
      %v835 = vunpack.c.l.b16 %v796
      %v836 = vunpack.c.l.b16 %v797
      %v837 = vunpack.c.l.b16 %v798
      %v838 = vunpack.c.l.b16 %v799
      %v839 = vunpack.c.l.b16 %v800
      %v840 = vunpack.c.l.b16 %v801
      %v841 = vpack.c.b16 %v826, %v825
      %v842 = vpack.c.b16 %v828, %v827
      %v843 = vpack.c.b16 %v830, %v829
      %v844 = vpack.c.b16 %v832, %v831
      %v845 = vpack.c.b16 %v834, %v833
      %v846 = vpack.c.b16 %v836, %v835
      %v847 = vpack.c.b16 %v838, %v837
      %v848 = vpack.c.b16 %v840, %v839
      %857 = vmatprep.subr.bf16.mxu0 0
      %858 = vmatpush1.bf16.msra.mxu0 %v841
      %859 = vmatprep.subr.bf16.mxu0 0
      %860 = vmatpush1.bf16.msra.mxu0 %v842
      %861 = vmatprep.subr.bf16.mxu0 0
      %862 = vmatpush1.bf16.msra.mxu0 %v843
      %863 = vmatprep.subr.bf16.mxu0 0
      %864 = vmatpush1.bf16.msra.mxu0 %v844
      %865 = vmatprep.subr.bf16.mxu0 0
      %866 = vmatpush1.bf16.msra.mxu0 %v845
      %867 = vmatprep.subr.bf16.mxu0 0
      %868 = vmatpush1.bf16.msra.mxu0 %v846
      %869 = vmatprep.subr.bf16.mxu0 0
      %870 = vmatpush1.bf16.msra.mxu0 %v847
      %871 = vmatprep.subr.bf16.mxu0 0
      %872 = vmatpush1.bf16.msra.mxu0 %v848
      %873 = vmatprep.subr.bf16.mxu0 0
      %874 = vmatpush1.bf16.msra.mxu0 0
      %875 = vmatprep.subr.bf16.mxu0 0
      %876 = vmatpush1.bf16.msra.mxu0 0
      %877 = vmatprep.subr.bf16.mxu0 0
      %878 = vmatpush1.bf16.msra.mxu0 0
      %879 = vmatprep.subr.bf16.mxu0 0
      %880 = vmatpush1.bf16.msra.mxu0 0
      %881 = vmatprep.subr.bf16.mxu0 0
      %882 = vmatpush1.bf16.msra.mxu0 0
      %883 = vmatprep.subr.bf16.mxu0 0
      %884 = vmatpush1.bf16.msra.mxu0 0
      %885 = vmatprep.subr.bf16.mxu0 0
      %886 = vmatpush1.bf16.msra.mxu0 0
      %887 = vmatprep.subr.bf16.mxu0 0
      %888 = vmatpush1.bf16.msra.mxu0 0
      %889 = vmatprep.mubr.bf16.mxu0 0
      %890 = vmatmul.mubr.bf16.gmra.mrb[0].mxu0 %v778
      %v891 = vpop.f32.mrb[0].mxu0
      %v892 = vadd.f32 %v807, %v891
      %v893 = vpop.f32.mrb[0].mxu0
      %v894 = vpop.f32.mrb[0].mxu0
      %v895 = vadd.f32 %v807, %v894
      %v896 = vpop.f32.mrb[0].mxu0
      %897 = vmatprep.mubr.bf16.mxu0 0
      %898 = vmatmul.mubr.bf16.gmra.mrb[0].mxu0 %v779
      %v899 = vpop.f32.mrb[0].mxu0
      %v900 = vadd.f32 %v807, %v899
      %v901 = vpop.f32.mrb[0].mxu0
      %v902 = vpop.f32.mrb[0].mxu0
      %v903 = vadd.f32 %v807, %v902
      %v904 = vpop.f32.mrb[0].mxu0
      %905 = vmatprep.mubr.bf16.mxu0 0
      %906 = vmatmul.mubr.bf16.gmra.mrb[0].mxu0 %v780
      %v907 = vpop.f32.mrb[0].mxu0
      %v908 = vadd.f32 %v807, %v907
      %v909 = vpop.f32.mrb[0].mxu0
      %v910 = vpop.f32.mrb[0].mxu0
      %v911 = vadd.f32 %v807, %v910
      %v912 = vpop.f32.mrb[0].mxu0
      %913 = vmatprep.mubr.bf16.mxu0 0
      %914 = vmatmul.mubr.bf16.gmra.mrb[0].mxu0 %v781
      %v915 = vpop.f32.mrb[0].mxu0
      %v916 = vadd.f32 %v807, %v915
      %v917 = vpop.f32.mrb[0].mxu0
      %v918 = vpop.f32.mrb[0].mxu0
      %v919 = vadd.f32 %v807, %v918
      %v920 = vpop.f32.mrb[0].mxu0
      %921 = vmatprep.mubr.bf16.mxu0 0
      %922 = vmatmul.mubr.bf16.gmra.mrb[0].mxu0 %v782
      %v923 = vpop.f32.mrb[0].mxu0
      %v924 = vadd.f32 %v807, %v923
      %v925 = vpop.f32.mrb[0].mxu0
      %v926 = vpop.f32.mrb[0].mxu0
      %v927 = vadd.f32 %v807, %v926
      %v928 = vpop.f32.mrb[0].mxu0
      %929 = vmatprep.mubr.bf16.mxu0 0
      %930 = vmatmul.mubr.bf16.gmra.mrb[0].mxu0 %v783
      %v931 = vpop.f32.mrb[0].mxu0
      %v932 = vadd.f32 %v807, %v931
      %v933 = vpop.f32.mrb[0].mxu0
      %v934 = vpop.f32.mrb[0].mxu0
      %v935 = vadd.f32 %v807, %v934
      %v936 = vpop.f32.mrb[0].mxu0
      %937 = vmatprep.mubr.bf16.mxu0 0
      %938 = vmatmul.mubr.bf16.gmra.mrb[0].mxu0 %v784
      %v939 = vpop.f32.mrb[0].mxu0
      %v940 = vadd.f32 %v807, %v939
      %v941 = vpop.f32.mrb[0].mxu0
      %v942 = vpop.f32.mrb[0].mxu0
      %v943 = vadd.f32 %v807, %v942
      %v944 = vpop.f32.mrb[0].mxu0
      %945 = vmatprep.mubr.bf16.mxu0 0
      %946 = vmatmul.mubr.bf16.gmra.mrb[0].mxu0 %v785
      %v947 = vpop.f32.mrb[0].mxu0
      %v948 = vadd.f32 %v807, %v947
      %v949 = vpop.f32.mrb[0].mxu0
      %v950 = vpop.f32.mrb[0].mxu0
      %v951 = vadd.f32 %v807, %v950
      %v952 = vpop.f32.mrb[0].mxu0
      %953 = vdwg.mxu0
      %v954 = vld [vmem:[%s6] sm:$0xf]
      %v955 = vld [vmem:[%s6 + $0x4] sm:$0xf]
      %v956 = vld [vmem:[%s6 + $0x8] sm:$0xf]
      %v957 = vld [vmem:[%s6 + $0xc] sm:$0xf]
      %v958 = vld [vmem:[%s6 + $0x10] sm:$0xf]
      %v959 = vld [vmem:[%s6 + $0x14] sm:$0xf]
      %v960 = vld [vmem:[%s6 + $0x18] sm:$0xf]
      %v961 = vld [vmem:[%s6 + $0x1c] sm:$0xf]
      %v962 = vld [vmem:[%s6 + $0x20] sm:$0xf]
      %v963 = vld [vmem:[%s6 + $0x24] sm:$0xf]
      %v964 = vld [vmem:[%s6 + $0x28] sm:$0xf]
      %v965 = vld [vmem:[%s6 + $0x2c] sm:$0xf]
      %v966 = vld [vmem:[%s6 + $0x30] sm:$0xf]
      %v967 = vld [vmem:[%s6 + $0x34] sm:$0xf]
      %v968 = vld [vmem:[%s6 + $0x38] sm:$0xf]
      %v969 = vld [vmem:[%s6 + $0x3c] sm:$0xf]
      %v970 = vld [vmem:[%s7] sm:$0x1]
      %v972 = vlaneseq
      %v973 = vshrl.u32 %v972, 7
      %v974 = vsub.s32 0, %v973
      %v975 = vrot.slane %v970, %v974
      %v993 = vunpack.c.l.b16 %v954
      %v994 = vunpack.c.l.b16 %v955
      %v995 = vunpack.c.l.b16 %v956
      %v996 = vunpack.c.l.b16 %v957
      %v997 = vunpack.c.l.b16 %v958
      %v998 = vunpack.c.l.b16 %v959
      %v999 = vunpack.c.l.b16 %v960
      %v1000 = vunpack.c.l.b16 %v961
      %v1001 = vunpack.c.l.b16 %v962
      %v1002 = vunpack.c.l.b16 %v963
      %v1003 = vunpack.c.l.b16 %v964
      %v1004 = vunpack.c.l.b16 %v965
      %v1005 = vunpack.c.l.b16 %v966
      %v1006 = vunpack.c.l.b16 %v967
      %v1007 = vunpack.c.l.b16 %v968
      %v1008 = vunpack.c.l.b16 %v969
      %v1009 = vpack.c.b16 %v994, %v993
      %v1010 = vpack.c.b16 %v996, %v995
      %v1011 = vpack.c.b16 %v998, %v997
      %v1012 = vpack.c.b16 %v1000, %v999
      %v1013 = vpack.c.b16 %v1002, %v1001
      %v1014 = vpack.c.b16 %v1004, %v1003
      %v1015 = vpack.c.b16 %v1006, %v1005
      %v1016 = vpack.c.b16 %v1008, %v1007
      %1025 = vmatprep.subr.bf16.mxu0 0
      %1026 = vmatpush1.bf16.msra.mxu0 %v1009
      %1027 = vmatprep.subr.bf16.mxu0 0
      %1028 = vmatpush1.bf16.msra.mxu0 %v1010
      %1029 = vmatprep.subr.bf16.mxu0 0
      %1030 = vmatpush1.bf16.msra.mxu0 %v1011
      %1031 = vmatprep.subr.bf16.mxu0 0
      %1032 = vmatpush1.bf16.msra.mxu0 %v1012
      %1033 = vmatprep.subr.bf16.mxu0 0
      %1034 = vmatpush1.bf16.msra.mxu0 %v1013
      %1035 = vmatprep.subr.bf16.mxu0 0
      %1036 = vmatpush1.bf16.msra.mxu0 %v1014
      %1037 = vmatprep.subr.bf16.mxu0 0
      %1038 = vmatpush1.bf16.msra.mxu0 %v1015
      %1039 = vmatprep.subr.bf16.mxu0 0
      %1040 = vmatpush1.bf16.msra.mxu0 %v1016
      %1041 = vmatprep.subr.bf16.mxu0 0
      %1042 = vmatpush1.bf16.msra.mxu0 0
      %1043 = vmatprep.subr.bf16.mxu0 0
      %1044 = vmatpush1.bf16.msra.mxu0 0
      %1045 = vmatprep.subr.bf16.mxu0 0
      %1046 = vmatpush1.bf16.msra.mxu0 0
      %1047 = vmatprep.subr.bf16.mxu0 0
      %1048 = vmatpush1.bf16.msra.mxu0 0
      %1049 = vmatprep.subr.bf16.mxu0 0
      %1050 = vmatpush1.bf16.msra.mxu0 0
      %1051 = vmatprep.subr.bf16.mxu0 0
      %1052 = vmatpush1.bf16.msra.mxu0 0
      %1053 = vmatprep.subr.bf16.mxu0 0
      %1054 = vmatpush1.bf16.msra.mxu0 0
      %1055 = vmatprep.subr.bf16.mxu0 0
      %1056 = vmatpush1.bf16.msra.mxu0 0
      %1057 = vmatprep.mubr.bf16.mxu0 0
      %1058 = vmatmul.mubr.bf16.gmra.mrb[0].mxu0 %v778
      %v1059 = vpop.f32.mrb[0].mxu0
      %v1060 = vadd.f32 %v975, %v1059
      %v1061 = vpop.f32.mrb[0].mxu0
      %v1062 = vpop.f32.mrb[0].mxu0
      %v1063 = vadd.f32 %v975, %v1062
      %v1064 = vpop.f32.mrb[0].mxu0
      %1065 = vmatprep.mubr.bf16.mxu0 0
      %1066 = vmatmul.mubr.bf16.gmra.mrb[0].mxu0 %v779
      %v1067 = vpop.f32.mrb[0].mxu0
      %v1068 = vadd.f32 %v975, %v1067
      %v1069 = vpop.f32.mrb[0].mxu0
      %v1070 = vpop.f32.mrb[0].mxu0
      %v1071 = vadd.f32 %v975, %v1070
      %v1072 = vpop.f32.mrb[0].mxu0
      %1073 = vmatprep.mubr.bf16.mxu0 0
      %1074 = vmatmul.mubr.bf16.gmra.mrb[0].mxu0 %v780
      %v1075 = vpop.f32.mrb[0].mxu0
      %v1076 = vadd.f32 %v975, %v1075
      %v1077 = vpop.f32.mrb[0].mxu0
      %v1078 = vpop.f32.mrb[0].mxu0
      %v1079 = vadd.f32 %v975, %v1078
      %v1080 = vpop.f32.mrb[0].mxu0
      %1081 = vmatprep.mubr.bf16.mxu0 0
      %1082 = vmatmul.mubr.bf16.gmra.mrb[0].mxu0 %v781
      %v1083 = vpop.f32.mrb[0].mxu0
      %v1084 = vadd.f32 %v975, %v1083
      %v1085 = vpop.f32.mrb[0].mxu0
      %v1086 = vpop.f32.mrb[0].mxu0
      %v1087 = vadd.f32 %v975, %v1086
      %v1088 = vpop.f32.mrb[0].mxu0
      %1089 = vmatprep.mubr.bf16.mxu0 0
      %1090 = vmatmul.mubr.bf16.gmra.mrb[0].mxu0 %v782
      %v1091 = vpop.f32.mrb[0].mxu0
      %v1092 = vadd.f32 %v975, %v1091
      %v1093 = vpop.f32.mrb[0].mxu0
      %v1094 = vpop.f32.mrb[0].mxu0
      %v1095 = vadd.f32 %v975, %v1094
      %v1096 = vpop.f32.mrb[0].mxu0
      %1097 = vmatprep.mubr.bf16.mxu0 0
      %1098 = vmatmul.mubr.bf16.gmra.mrb[0].mxu0 %v783
      %v1099 = vpop.f32.mrb[0].mxu0
      %v1100 = vadd.f32 %v975, %v1099
      %v1101 = vpop.f32.mrb[0].mxu0
      %v1102 = vpop.f32.mrb[0].mxu0
      %v1103 = vadd.f32 %v975, %v1102
      %v1104 = vpop.f32.mrb[0].mxu0
      %1105 = vmatprep.mubr.bf16.mxu0 0
      %1106 = vmatmul.mubr.bf16.gmra.mrb[0].mxu0 %v784
      %v1107 = vpop.f32.mrb[0].mxu0
      %v1108 = vadd.f32 %v975, %v1107
      %v1109 = vpop.f32.mrb[0].mxu0
      %v1110 = vpop.f32.mrb[0].mxu0
      %v1111 = vadd.f32 %v975, %v1110
      %v1112 = vpop.f32.mrb[0].mxu0
      %1113 = vmatprep.mubr.bf16.mxu0 0
      %1114 = vmatmul.mubr.bf16.gmra.mrb[0].mxu0 %v785
      %v1115 = vpop.f32.mrb[0].mxu0
      %v1116 = vadd.f32 %v975, %v1115
      %v1117 = vpop.f32.mrb[0].mxu0
      %v1118 = vpop.f32.mrb[0].mxu0
      %v1119 = vadd.f32 %v975, %v1118
      %v1120 = vpop.f32.mrb[0].mxu0
      %1121 = vdwg.mxu0
      %v1122 = vmul.f32 %v1060, 0.5
      %v1123 = vmul.f32 %v1063, 0.5
      %v1124 = vmul.f32 %v1068, 0.5
      %v1125 = vmul.f32 %v1071, 0.5
      %v1126 = vmul.f32 %v1076, 0.5
      %v1127 = vmul.f32 %v1079, 0.5
      %v1128 = vmul.f32 %v1084, 0.5
      %v1129 = vmul.f32 %v1087, 0.5
      %v1130 = vmul.f32 %v1092, 0.5
      %v1131 = vmul.f32 %v1095, 0.5
      %v1132 = vmul.f32 %v1100, 0.5
      %v1133 = vmul.f32 %v1103, 0.5
      %v1134 = vmul.f32 %v1108, 0.5
      %v1135 = vmul.f32 %v1111, 0.5
      %v1136 = vmul.f32 %v1116, 0.5
      %v1137 = vmul.f32 %v1119, 0.5
      %v1138 = vmul.f32 %v1122, 1.442695
      %v1139 = vpow.pop %v1138
      %v1140 = vmul.f32 %v1123, 1.442695
      %v1141 = vpow.pop %v1140
      %v1142 = vmul.f32 %v1124, 1.442695
      %v1143 = vpow.pop %v1142
      %v1144 = vmul.f32 %v1125, 1.442695
      %v1145 = vpow.pop %v1144
      %v1146 = vmul.f32 %v1126, 1.442695
      %v1147 = vpow.pop %v1146
      %v1148 = vmul.f32 %v1127, 1.442695
      %v1149 = vpow.pop %v1148
      %v1150 = vmul.f32 %v1128, 1.442695
      %v1151 = vpow.pop %v1150
      %v1152 = vmul.f32 %v1129, 1.442695
      %v1153 = vpow.pop %v1152
      %v1154 = vmul.f32 %v1130, 1.442695
      %v1155 = vpow.pop %v1154
      %v1156 = vmul.f32 %v1131, 1.442695
      %v1157 = vpow.pop %v1156
      %v1158 = vmul.f32 %v1132, 1.442695
      %v1159 = vpow.pop %v1158
      %v1160 = vmul.f32 %v1133, 1.442695
      %v1161 = vpow.pop %v1160
      %v1162 = vmul.f32 %v1134, 1.442695
      %v1163 = vpow.pop %v1162
      %v1164 = vmul.f32 %v1135, 1.442695
      %v1165 = vpow.pop %v1164
      %v1166 = vmul.f32 %v1136, 1.442695
      %v1167 = vpow.pop %v1166
      %v1168 = vmul.f32 %v1137, 1.442695
      %v1169 = vpow.pop %v1168
      %v1170 = vld [vmem:[%s534] sm:$0xff]
      %v1171 = vld [vmem:[%s534 + $0x8] sm:$0xff]
      %v1172 = vld [vmem:[%s534 + $0x10] sm:$0xff]
      %v1173 = vld [vmem:[%s534 + $0x18] sm:$0xff]
      %v1174 = vld [vmem:[%s534 + $0x20] sm:$0xff]
      %v1175 = vld [vmem:[%s534 + $0x28] sm:$0xff]
      %v1176 = vld [vmem:[%s534 + $0x30] sm:$0xff]
      %v1177 = vld [vmem:[%s534 + $0x38] sm:$0xff]
      %v1178 = vld [vmem:[%s534 + $0x40] sm:$0xff]
      %v1179 = vld [vmem:[%s534 + $0x48] sm:$0xff]
      %v1180 = vld [vmem:[%s534 + $0x50] sm:$0xff]
      %v1181 = vld [vmem:[%s534 + $0x58] sm:$0xff]
      %v1182 = vld [vmem:[%s534 + $0x60] sm:$0xff]
      %v1183 = vld [vmem:[%s534 + $0x68] sm:$0xff]
      %v1184 = vld [vmem:[%s534 + $0x70] sm:$0xff]
      %v1185 = vld [vmem:[%s534 + $0x78] sm:$0xff]
      %v1186 = vmul.f32 %v1139, %v1170
      %v1187 = vmul.f32 %v1141, %v1171
      %v1188 = vmul.f32 %v1143, %v1172
      %v1189 = vmul.f32 %v1145, %v1173
      %v1190 = vmul.f32 %v1147, %v1174
      %v1191 = vmul.f32 %v1149, %v1175
      %v1192 = vmul.f32 %v1151, %v1176
      %v1193 = vmul.f32 %v1153, %v1177
      %v1194 = vmul.f32 %v1155, %v1178
      %v1195 = vmul.f32 %v1157, %v1179
      %v1196 = vmul.f32 %v1159, %v1180
      %v1197 = vmul.f32 %v1161, %v1181
      %v1198 = vmul.f32 %v1163, %v1182
      %v1199 = vmul.f32 %v1165, %v1183
      %v1200 = vmul.f32 %v1167, %v1184
      %v1201 = vmul.f32 %v1169, %v1185
      %v1202 = vadd.f32 %v892, %v1186
      %v1203 = vadd.f32 %v895, %v1187
      %v1204 = vadd.f32 %v900, %v1188
      %v1205 = vadd.f32 %v903, %v1189
      %v1206 = vadd.f32 %v908, %v1190
      %v1207 = vadd.f32 %v911, %v1191
      %v1208 = vadd.f32 %v916, %v1192
      %v1209 = vadd.f32 %v919, %v1193
      %v1210 = vadd.f32 %v924, %v1194
      %v1211 = vadd.f32 %v927, %v1195
      %v1212 = vadd.f32 %v932, %v1196
      %v1213 = vadd.f32 %v935, %v1197
      %v1214 = vadd.f32 %v940, %v1198
      %v1215 = vadd.f32 %v943, %v1199
      %v1216 = vadd.f32 %v948, %v1200
      %v1217 = vadd.f32 %v951, %v1201
      %v1218 = vpack.c.bf16 %v895, %v892
      %v1219 = vpack.c.bf16 %v903, %v900
      %v1220 = vpack.c.bf16 %v911, %v908
      %v1221 = vpack.c.bf16 %v919, %v916
      %v1222 = vpack.c.bf16 %v927, %v924
      %v1223 = vpack.c.bf16 %v935, %v932
      %v1224 = vpack.c.bf16 %v943, %v940
      %v1225 = vpack.c.bf16 %v951, %v948
      %v1226 = vld [vmem:[%s8] sm:$0xf]
      %v1227 = vld [vmem:[%s9] sm:$0x1]
      %v1229 = vlaneseq
      %v1230 = vshrl.u32 %v1229, 7
      %v1231 = vsub.s32 0, %v1230
      %v1232 = vrot.slane %v1227, %v1231
      %vm1234 = vcmask 64512
      %v1236 = vsel %vm1234, %v1218, 0
      %v1239 = vsel %vm1234, %v1219, 0
      %v1242 = vsel %vm1234, %v1220, 0
      %v1245 = vsel %vm1234, %v1221, 0
      %v1248 = vsel %vm1234, %v1222, 0
      %v1251 = vsel %vm1234, %v1223, 0
      %v1254 = vsel %vm1234, %v1224, 0
      %v1257 = vsel %vm1234, %v1225, 0
      %vm1259 = vcmask 1043456
      %v1261 = vsel %vm1259, %v1226, 0
      %1263 = vmatprep.subr.bf16.mxu0 0
      %1264 = vmatpush1.bf16.msra.mxu0 %v1261
      %1265 = vmatprep.subr.bf16.mxu0 0
      %1266 = vmatpush1.bf16.msra.mxu0 0
      %1267 = vmatprep.subr.bf16.mxu0 0
      %1268 = vmatpush1.bf16.msra.mxu0 0
      %1269 = vmatprep.subr.bf16.mxu0 0
      %1270 = vmatpush1.bf16.msra.mxu0 0
      %1271 = vmatprep.subr.bf16.mxu0 0
      %1272 = vmatpush1.bf16.msra.mxu0 0
      %1273 = vmatprep.subr.bf16.mxu0 0
      %1274 = vmatpush1.bf16.msra.mxu0 0
      %1275 = vmatprep.subr.bf16.mxu0 0
      %1276 = vmatpush1.bf16.msra.mxu0 0
      %1277 = vmatprep.subr.bf16.mxu0 0
      %1278 = vmatpush1.bf16.msra.mxu0 0
      %1279 = vmatprep.subr.bf16.mxu0 0
      %1280 = vmatpush1.bf16.msra.mxu0 0
      %1281 = vmatprep.subr.bf16.mxu0 0
      %1282 = vmatpush1.bf16.msra.mxu0 0
      %1283 = vmatprep.subr.bf16.mxu0 0
      %1284 = vmatpush1.bf16.msra.mxu0 0
      %1285 = vmatprep.subr.bf16.mxu0 0
      %1286 = vmatpush1.bf16.msra.mxu0 0
      %1287 = vmatprep.subr.bf16.mxu0 0
      %1288 = vmatpush1.bf16.msra.mxu0 0
      %1289 = vmatprep.subr.bf16.mxu0 0
      %1290 = vmatpush1.bf16.msra.mxu0 0
      %1291 = vmatprep.subr.bf16.mxu0 0
      %1292 = vmatpush1.bf16.msra.mxu0 0
      %1293 = vmatprep.subr.bf16.mxu0 0
      %1294 = vmatpush1.bf16.msra.mxu0 0
      %1295 = vmatprep.mubr.bf16.mxu0 0
      %1296 = vmatmul.mubr.bf16.gmra.mrb[0].mxu0 %v1236
      %v1297 = vpop.f32.mrb[0].mxu0
      %v1298 = vadd.f32 %v1232, %v1297
      %v1299 = vpop.f32.mrb[0].mxu0
      %v1300 = vpop.f32.mrb[0].mxu0
      %v1301 = vadd.f32 %v1232, %v1300
      %v1302 = vpop.f32.mrb[0].mxu0
      %1303 = vmatprep.mubr.bf16.mxu0 0
      %1304 = vmatmul.mubr.bf16.gmra.mrb[0].mxu0 %v1239
      %v1305 = vpop.f32.mrb[0].mxu0
      %v1306 = vadd.f32 %v1232, %v1305
      %v1307 = vpop.f32.mrb[0].mxu0
      %v1308 = vpop.f32.mrb[0].mxu0
      %v1309 = vadd.f32 %v1232, %v1308
      %v1310 = vpop.f32.mrb[0].mxu0
      %1311 = vmatprep.mubr.bf16.mxu0 0
      %1312 = vmatmul.mubr.bf16.gmra.mrb[0].mxu0 %v1242
      %v1313 = vpop.f32.mrb[0].mxu0
      %v1314 = vadd.f32 %v1232, %v1313
      %v1315 = vpop.f32.mrb[0].mxu0
      %v1316 = vpop.f32.mrb[0].mxu0
      %v1317 = vadd.f32 %v1232, %v1316
      %v1318 = vpop.f32.mrb[0].mxu0
      %1319 = vmatprep.mubr.bf16.mxu0 0
      %1320 = vmatmul.mubr.bf16.gmra.mrb[0].mxu0 %v1245
      %v1321 = vpop.f32.mrb[0].mxu0
      %v1322 = vadd.f32 %v1232, %v1321
      %v1323 = vpop.f32.mrb[0].mxu0
      %v1324 = vpop.f32.mrb[0].mxu0
      %v1325 = vadd.f32 %v1232, %v1324
      %v1326 = vpop.f32.mrb[0].mxu0
      %1327 = vmatprep.mubr.bf16.mxu0 0
      %1328 = vmatmul.mubr.bf16.gmra.mrb[0].mxu0 %v1248
      %v1329 = vpop.f32.mrb[0].mxu0
      %v1330 = vadd.f32 %v1232, %v1329
      %v1331 = vpop.f32.mrb[0].mxu0
      %v1332 = vpop.f32.mrb[0].mxu0
      %v1333 = vadd.f32 %v1232, %v1332
      %v1334 = vpop.f32.mrb[0].mxu0
      %1335 = vmatprep.mubr.bf16.mxu0 0
      %1336 = vmatmul.mubr.bf16.gmra.mrb[0].mxu0 %v1251
      %v1337 = vpop.f32.mrb[0].mxu0
      %v1338 = vadd.f32 %v1232, %v1337
      %v1339 = vpop.f32.mrb[0].mxu0
      %v1340 = vpop.f32.mrb[0].mxu0
      %v1341 = vadd.f32 %v1232, %v1340
      %v1342 = vpop.f32.mrb[0].mxu0
      %1343 = vmatprep.mubr.bf16.mxu0 0
      %1344 = vmatmul.mubr.bf16.gmra.mrb[0].mxu0 %v1254
      %v1345 = vpop.f32.mrb[0].mxu0
      %v1346 = vadd.f32 %v1232, %v1345
      %v1347 = vpop.f32.mrb[0].mxu0
      %v1348 = vpop.f32.mrb[0].mxu0
      %v1349 = vadd.f32 %v1232, %v1348
      %v1350 = vpop.f32.mrb[0].mxu0
      %1351 = vmatprep.mubr.bf16.mxu0 0
      %1352 = vmatmul.mubr.bf16.gmra.mrb[0].mxu0 %v1257
      %v1353 = vpop.f32.mrb[0].mxu0
      %v1354 = vadd.f32 %v1232, %v1353
      %v1355 = vpop.f32.mrb[0].mxu0
      %v1356 = vpop.f32.mrb[0].mxu0
      %v1357 = vadd.f32 %v1232, %v1356
      %v1358 = vpop.f32.mrb[0].mxu0
      %1359 = vdwg.mxu0
      %v1360 = vmax.f32 %v1298, 0.0
      %v1361 = vmax.f32 %v1301, 0.0
      %v1362 = vmax.f32 %v1306, 0.0
      %v1363 = vmax.f32 %v1309, 0.0
      %v1364 = vmax.f32 %v1314, 0.0
      %v1365 = vmax.f32 %v1317, 0.0
      %v1366 = vmax.f32 %v1322, 0.0
      %v1367 = vmax.f32 %v1325, 0.0
      %v1368 = vmax.f32 %v1330, 0.0
      %v1369 = vmax.f32 %v1333, 0.0
      %v1370 = vmax.f32 %v1338, 0.0
      %v1371 = vmax.f32 %v1341, 0.0
      %v1372 = vmax.f32 %v1346, 0.0
      %v1373 = vmax.f32 %v1349, 0.0
      %v1374 = vmax.f32 %v1354, 0.0
      %v1375 = vmax.f32 %v1357, 0.0
      %v1376 = vpack.c.bf16 %v1361, %v1360
      %v1377 = vpack.c.bf16 %v1363, %v1362
      %v1378 = vpack.c.bf16 %v1365, %v1364
      %v1379 = vpack.c.bf16 %v1367, %v1366
      %v1380 = vpack.c.bf16 %v1369, %v1368
      %v1381 = vpack.c.bf16 %v1371, %v1370
      %v1382 = vpack.c.bf16 %v1373, %v1372
      %v1383 = vpack.c.bf16 %v1375, %v1374
      %v1384 = vld [vmem:[%s10] sm:$0xf]
      %v1385 = vld [vmem:[%s10 + $0x4] sm:$0xf]
      %v1386 = vld [vmem:[%s10 + $0x8] sm:$0xf]
      %v1387 = vld [vmem:[%s10 + $0xc] sm:$0xf]
      %v1388 = vld [vmem:[%s10 + $0x10] sm:$0xf]
      %v1389 = vld [vmem:[%s10 + $0x14] sm:$0xf]
      %v1390 = vld [vmem:[%s10 + $0x18] sm:$0xf]
      %v1391 = vld [vmem:[%s10 + $0x1c] sm:$0xf]
      %v1392 = vld [vmem:[%s10 + $0x20] sm:$0xf]
      %v1393 = vld [vmem:[%s10 + $0x24] sm:$0xf]
      %v1394 = vld [vmem:[%s10 + $0x28] sm:$0xf]
      %v1395 = vld [vmem:[%s10 + $0x2c] sm:$0xf]
      %v1396 = vld [vmem:[%s10 + $0x30] sm:$0xf]
      %v1397 = vld [vmem:[%s10 + $0x34] sm:$0xf]
      %v1398 = vld [vmem:[%s10 + $0x38] sm:$0xf]
      %v1399 = vld [vmem:[%s10 + $0x3c] sm:$0xf]
      %v1400 = vld [vmem:[%s11] sm:$0x1]
      %v1402 = vlaneseq
      %v1403 = vshrl.u32 %v1402, 7
      %v1404 = vsub.s32 0, %v1403
      %v1405 = vrot.slane %v1400, %v1404
      %v1423 = vunpack.c.l.b16 %v1384
      %v1424 = vunpack.c.l.b16 %v1385
      %v1425 = vunpack.c.l.b16 %v1386
      %v1426 = vunpack.c.l.b16 %v1387
      %v1427 = vunpack.c.l.b16 %v1388
      %v1428 = vunpack.c.l.b16 %v1389
      %v1429 = vunpack.c.l.b16 %v1390
      %v1430 = vunpack.c.l.b16 %v1391
      %v1431 = vunpack.c.l.b16 %v1392
      %v1432 = vunpack.c.l.b16 %v1393
      %v1433 = vunpack.c.l.b16 %v1394
      %v1434 = vunpack.c.l.b16 %v1395
      %v1435 = vunpack.c.l.b16 %v1396
      %v1436 = vunpack.c.l.b16 %v1397
      %v1437 = vunpack.c.l.b16 %v1398
      %v1438 = vunpack.c.l.b16 %v1399
      %v1439 = vpack.c.b16 %v1424, %v1423
      %v1440 = vpack.c.b16 %v1426, %v1425
      %v1441 = vpack.c.b16 %v1428, %v1427
      %v1442 = vpack.c.b16 %v1430, %v1429
      %v1443 = vpack.c.b16 %v1432, %v1431
      %v1444 = vpack.c.b16 %v1434, %v1433
      %v1445 = vpack.c.b16 %v1436, %v1435
      %v1446 = vpack.c.b16 %v1438, %v1437
      %1455 = vmatprep.subr.bf16.mxu0 0
      %1456 = vmatpush1.bf16.msra.mxu0 %v1439
      %1457 = vmatprep.subr.bf16.mxu0 0
      %1458 = vmatpush1.bf16.msra.mxu0 %v1440
      %1459 = vmatprep.subr.bf16.mxu0 0
      %1460 = vmatpush1.bf16.msra.mxu0 %v1441
      %1461 = vmatprep.subr.bf16.mxu0 0
      %1462 = vmatpush1.bf16.msra.mxu0 %v1442
      %1463 = vmatprep.subr.bf16.mxu0 0
      %1464 = vmatpush1.bf16.msra.mxu0 %v1443
      %1465 = vmatprep.subr.bf16.mxu0 0
      %1466 = vmatpush1.bf16.msra.mxu0 %v1444
      %1467 = vmatprep.subr.bf16.mxu0 0
      %1468 = vmatpush1.bf16.msra.mxu0 %v1445
      %1469 = vmatprep.subr.bf16.mxu0 0
      %1470 = vmatpush1.bf16.msra.mxu0 %v1446
      %1471 = vmatprep.subr.bf16.mxu0 0
      %1472 = vmatpush1.bf16.msra.mxu0 0
      %1473 = vmatprep.subr.bf16.mxu0 0
      %1474 = vmatpush1.bf16.msra.mxu0 0
      %1475 = vmatprep.subr.bf16.mxu0 0
      %1476 = vmatpush1.bf16.msra.mxu0 0
      %1477 = vmatprep.subr.bf16.mxu0 0
      %1478 = vmatpush1.bf16.msra.mxu0 0
      %1479 = vmatprep.subr.bf16.mxu0 0
      %1480 = vmatpush1.bf16.msra.mxu0 0
      %1481 = vmatprep.subr.bf16.mxu0 0
      %1482 = vmatpush1.bf16.msra.mxu0 0
      %1483 = vmatprep.subr.bf16.mxu0 0
      %1484 = vmatpush1.bf16.msra.mxu0 0
      %1485 = vmatprep.subr.bf16.mxu0 0
      %1486 = vmatpush1.bf16.msra.mxu0 0
      %1487 = vmatprep.mubr.bf16.mxu0 0
      %1488 = vmatmul.mubr.bf16.gmra.mrb[0].mxu0 %v1376
      %v1489 = vpop.f32.mrb[0].mxu0
      %v1490 = vadd.f32 %v1405, %v1489
      %v1491 = vpop.f32.mrb[0].mxu0
      %v1492 = vpop.f32.mrb[0].mxu0
      %v1493 = vadd.f32 %v1405, %v1492
      %v1494 = vpop.f32.mrb[0].mxu0
      %1495 = vmatprep.mubr.bf16.mxu0 0
      %1496 = vmatmul.mubr.bf16.gmra.mrb[0].mxu0 %v1377
      %v1497 = vpop.f32.mrb[0].mxu0
      %v1498 = vadd.f32 %v1405, %v1497
      %v1499 = vpop.f32.mrb[0].mxu0
      %v1500 = vpop.f32.mrb[0].mxu0
      %v1501 = vadd.f32 %v1405, %v1500
      %v1502 = vpop.f32.mrb[0].mxu0
      %1503 = vmatprep.mubr.bf16.mxu0 0
      %1504 = vmatmul.mubr.bf16.gmra.mrb[0].mxu0 %v1378
      %v1505 = vpop.f32.mrb[0].mxu0
      %v1506 = vadd.f32 %v1405, %v1505
      %v1507 = vpop.f32.mrb[0].mxu0
      %v1508 = vpop.f32.mrb[0].mxu0
      %v1509 = vadd.f32 %v1405, %v1508
      %v1510 = vpop.f32.mrb[0].mxu0
      %1511 = vmatprep.mubr.bf16.mxu0 0
      %1512 = vmatmul.mubr.bf16.gmra.mrb[0].mxu0 %v1379
      %v1513 = vpop.f32.mrb[0].mxu0
      %v1514 = vadd.f32 %v1405, %v1513
      %v1515 = vpop.f32.mrb[0].mxu0
      %v1516 = vpop.f32.mrb[0].mxu0
      %v1517 = vadd.f32 %v1405, %v1516
      %v1518 = vpop.f32.mrb[0].mxu0
      %1519 = vmatprep.mubr.bf16.mxu0 0
      %1520 = vmatmul.mubr.bf16.gmra.mrb[0].mxu0 %v1380
      %v1521 = vpop.f32.mrb[0].mxu0
      %v1522 = vadd.f32 %v1405, %v1521
      %v1523 = vpop.f32.mrb[0].mxu0
      %v1524 = vpop.f32.mrb[0].mxu0
      %v1525 = vadd.f32 %v1405, %v1524
      %v1526 = vpop.f32.mrb[0].mxu0
      %1527 = vmatprep.mubr.bf16.mxu0 0
      %1528 = vmatmul.mubr.bf16.gmra.mrb[0].mxu0 %v1381
      %v1529 = vpop.f32.mrb[0].mxu0
      %v1530 = vadd.f32 %v1405, %v1529
      %v1531 = vpop.f32.mrb[0].mxu0
      %v1532 = vpop.f32.mrb[0].mxu0
      %v1533 = vadd.f32 %v1405, %v1532
      %v1534 = vpop.f32.mrb[0].mxu0
      %1535 = vmatprep.mubr.bf16.mxu0 0
      %1536 = vmatmul.mubr.bf16.gmra.mrb[0].mxu0 %v1382
      %v1537 = vpop.f32.mrb[0].mxu0
      %v1538 = vadd.f32 %v1405, %v1537
      %v1539 = vpop.f32.mrb[0].mxu0
      %v1540 = vpop.f32.mrb[0].mxu0
      %v1541 = vadd.f32 %v1405, %v1540
      %v1542 = vpop.f32.mrb[0].mxu0
      %1543 = vmatprep.mubr.bf16.mxu0 0
      %1544 = vmatmul.mubr.bf16.gmra.mrb[0].mxu0 %v1383
      %v1545 = vpop.f32.mrb[0].mxu0
      %v1546 = vadd.f32 %v1405, %v1545
      %v1547 = vpop.f32.mrb[0].mxu0
      %v1548 = vpop.f32.mrb[0].mxu0
      %v1549 = vadd.f32 %v1405, %v1548
      %v1550 = vpop.f32.mrb[0].mxu0
      %1551 = vdwg.mxu0
      %1552 = vst.msk [vmem:[%s540] sm:$0xff] %vm640, %v1490
      %1553 = vst.msk [vmem:[%s540 + $0x8] sm:$0xff] %vm640, %v1493
      %1554 = vst.msk [vmem:[%s540 + $0x10] sm:$0xff] %vm640, %v1498
      %1555 = vst.msk [vmem:[%s540 + $0x18] sm:$0xff] %vm640, %v1501
      %1556 = vst.msk [vmem:[%s540 + $0x20] sm:$0xff] %vm640, %v1506
      %1557 = vst.msk [vmem:[%s540 + $0x28] sm:$0xff] %vm640, %v1509
      %1558 = vst.msk [vmem:[%s540 + $0x30] sm:$0xff] %vm640, %v1514
      %1559 = vst.msk [vmem:[%s540 + $0x38] sm:$0xff] %vm640, %v1517
      %1560 = vst.msk [vmem:[%s540 + $0x40] sm:$0xff] %vm640, %v1522
      %1561 = vst.msk [vmem:[%s540 + $0x48] sm:$0xff] %vm640, %v1525
      %1562 = vst.msk [vmem:[%s540 + $0x50] sm:$0xff] %vm640, %v1530
      %1563 = vst.msk [vmem:[%s540 + $0x58] sm:$0xff] %vm640, %v1533
      %1564 = vst.msk [vmem:[%s540 + $0x60] sm:$0xff] %vm640, %v1538
      %1565 = vst.msk [vmem:[%s540 + $0x68] sm:$0xff] %vm640, %v1541
      %1566 = vst.msk [vmem:[%s540 + $0x70] sm:$0xff] %vm640, %v1546
      %1567 = vst.msk [vmem:[%s540 + $0x78] sm:$0xff] %vm640, %v1549
      %1568 = vst.msk [vmem:[%s546] sm:$0xff] %vm1234, %v892
      %1569 = vst.msk [vmem:[%s546 + $0x8] sm:$0xff] %vm1234, %v895
      %1570 = vst.msk [vmem:[%s546 + $0x10] sm:$0xff] %vm1234, %v900
      %1571 = vst.msk [vmem:[%s546 + $0x18] sm:$0xff] %vm1234, %v903
      %1572 = vst.msk [vmem:[%s546 + $0x20] sm:$0xff] %vm1234, %v908
      %1573 = vst.msk [vmem:[%s546 + $0x28] sm:$0xff] %vm1234, %v911
      %1574 = vst.msk [vmem:[%s546 + $0x30] sm:$0xff] %vm1234, %v916
      %1575 = vst.msk [vmem:[%s546 + $0x38] sm:$0xff] %vm1234, %v919
      %1576 = vst.msk [vmem:[%s546 + $0x40] sm:$0xff] %vm1234, %v924
      %1577 = vst.msk [vmem:[%s546 + $0x48] sm:$0xff] %vm1234, %v927
      %1578 = vst.msk [vmem:[%s546 + $0x50] sm:$0xff] %vm1234, %v932
      %1579 = vst.msk [vmem:[%s546 + $0x58] sm:$0xff] %vm1234, %v935
      %1580 = vst.msk [vmem:[%s546 + $0x60] sm:$0xff] %vm1234, %v940
      %1581 = vst.msk [vmem:[%s546 + $0x68] sm:$0xff] %vm1234, %v943
      %1582 = vst.msk [vmem:[%s546 + $0x70] sm:$0xff] %vm1234, %v948
      %1583 = vst.msk [vmem:[%s546 + $0x78] sm:$0xff] %vm1234, %v951
      %1584 = vst.msk [vmem:[%s552] sm:$0xff] %vm1234, %v1060
      %1585 = vst.msk [vmem:[%s552 + $0x8] sm:$0xff] %vm1234, %v1063
      %1586 = vst.msk [vmem:[%s552 + $0x10] sm:$0xff] %vm1234, %v1068
      %1587 = vst.msk [vmem:[%s552 + $0x18] sm:$0xff] %vm1234, %v1071
      %1588 = vst.msk [vmem:[%s552 + $0x20] sm:$0xff] %vm1234, %v1076
      %1589 = vst.msk [vmem:[%s552 + $0x28] sm:$0xff] %vm1234, %v1079
      %1590 = vst.msk [vmem:[%s552 + $0x30] sm:$0xff] %vm1234, %v1084
      %1591 = vst.msk [vmem:[%s552 + $0x38] sm:$0xff] %vm1234, %v1087
      %1592 = vst.msk [vmem:[%s552 + $0x40] sm:$0xff] %vm1234, %v1092
      %1593 = vst.msk [vmem:[%s552 + $0x48] sm:$0xff] %vm1234, %v1095
      %1594 = vst.msk [vmem:[%s552 + $0x50] sm:$0xff] %vm1234, %v1100
      %1595 = vst.msk [vmem:[%s552 + $0x58] sm:$0xff] %vm1234, %v1103
      %1596 = vst.msk [vmem:[%s552 + $0x60] sm:$0xff] %vm1234, %v1108
      %1597 = vst.msk [vmem:[%s552 + $0x68] sm:$0xff] %vm1234, %v1111
      %1598 = vst.msk [vmem:[%s552 + $0x70] sm:$0xff] %vm1234, %v1116
      %1599 = vst.msk [vmem:[%s552 + $0x78] sm:$0xff] %vm1234, %v1119
      %1600 = vst.msk [vmem:[%s558] sm:$0xff] %vm1234, %v1202
      %1601 = vst.msk [vmem:[%s558 + $0x8] sm:$0xff] %vm1234, %v1203
      %1602 = vst.msk [vmem:[%s558 + $0x10] sm:$0xff] %vm1234, %v1204
      %1603 = vst.msk [vmem:[%s558 + $0x18] sm:$0xff] %vm1234, %v1205
      %1604 = vst.msk [vmem:[%s558 + $0x20] sm:$0xff] %vm1234, %v1206
      %1605 = vst.msk [vmem:[%s558 + $0x28] sm:$0xff] %vm1234, %v1207
      %1606 = vst.msk [vmem:[%s558 + $0x30] sm:$0xff] %vm1234, %v1208
      %1607 = vst.msk [vmem:[%s558 + $0x38] sm:$0xff] %vm1234, %v1209
      %1608 = vst.msk [vmem:[%s558 + $0x40] sm:$0xff] %vm1234, %v1210
      %1609 = vst.msk [vmem:[%s558 + $0x48] sm:$0xff] %vm1234, %v1211
      %1610 = vst.msk [vmem:[%s558 + $0x50] sm:$0xff] %vm1234, %v1212
      %1611 = vst.msk [vmem:[%s558 + $0x58] sm:$0xff] %vm1234, %v1213
      %1612 = vst.msk [vmem:[%s558 + $0x60] sm:$0xff] %vm1234, %v1214
      %1613 = vst.msk [vmem:[%s558 + $0x68] sm:$0xff] %vm1234, %v1215
      %1614 = vst.msk [vmem:[%s558 + $0x70] sm:$0xff] %vm1234, %v1216
      %1615 = vst.msk [vmem:[%s558 + $0x78] sm:$0xff] %vm1234, %v1217
      %s1616 = smul.u32 16, %s27
      %p1617 = scmp.lt.s32.totalorder %s1616, 31
      %s1618 = scalar_select %p1617, %s1616, 31
      %s1619 = smul.addr %s1618, 8
      %s1620 = scalar_lea.vmem %s12, %s1619
      %s1621 = smul.u32 16, %s27
      %p1622 = scmp.lt.s32.totalorder %s1621, 31
      %s1623 = scalar_select %p1622, %s1621, 31
      %s1624 = smul.addr %s1623, 8
      %s1625 = scalar_lea.vmem %s13, %s1624
      %s1626 = smul.u32 16, %s27
      %p1627 = scmp.lt.s32.totalorder %s1626, 31
      %s1628 = scalar_select %p1627, %s1626, 31
      %s1629 = smul.addr %s1628, 8
      %s1630 = scalar_lea.vmem %s14, %s1629
      %s1631 = smul.u32 16, %s27
      %p1632 = scmp.lt.s32.totalorder %s1631, 31
      %s1633 = scalar_select %p1632, %s1631, 31
      %s1634 = smul.addr %s1633, 8
      %s1635 = scalar_lea.vmem %s15, %s1634
      // Predicated region
      $region69: #{tpu_custom_call.1} parent=67 // pred_check
        %p1636 = pneg %p307
      $region70: #{tpu_custom_call.1} parent=67 // pred_check_branch
        %1638 = sbr.rel (%p1636) target = $region72
      $region71: #{tpu_custom_call.1} parent=67 // pred_region
        %s1639 = smul.u32 16, %s27
      $region72: #{tpu_custom_call.1} parent=67 // pred_fallthru
        _
      // Predicated region
      $region73: #{tpu_custom_call.1} parent=67 // pred_check
        %p1640 = pneg %p333
      $region74: #{tpu_custom_call.1} parent=67 // pred_check_branch
        %1642 = sbr.rel (%p1640) target = $region76
      $region75: #{tpu_custom_call.1} parent=67 // pred_region
        %s1643 = smul.u32 16, %s27
      $region76: #{tpu_custom_call.1} parent=67 // pred_fallthru
        _
      // Predicated region
      $region77: #{tpu_custom_call.1} parent=67 // pred_check
        %p1644 = pneg %p359
      $region78: #{tpu_custom_call.1} parent=67 // pred_check_branch
        %1646 = sbr.rel (%p1644) target = $region80
      $region79: #{tpu_custom_call.1} parent=67 // pred_region
        %s1647 = smul.u32 16, %s27
      $region80: #{tpu_custom_call.1} parent=67 // pred_fallthru
        _
      // Predicated region
      $region81: #{tpu_custom_call.1} parent=67 // pred_check
        %p1648 = pneg %p385
      $region82: #{tpu_custom_call.1} parent=67 // pred_check_branch
        %1650 = sbr.rel (%p1648) target = $region84
      $region83: #{tpu_custom_call.1} parent=67 // pred_region
        %s1651 = smul.u32 16, %s27
      $region84: #{tpu_custom_call.1} parent=67 // pred_fallthru
        _
    $region68: #{tpu_custom_call.1} parent=5 // pred_fallthru
      _
    %p1652 = scmp.le.s32.totalorder 2, %s22
    // Predicated region
    $region85: #{tpu_custom_call.1} parent=5 // pred_check
      %p1653 = pneg %p1652
    $region86: #{tpu_custom_call.1} parent=5 // pred_check_branch
      %1655 = sbr.rel (%p1653) target = $region88
    $region87: #{tpu_custom_call.1} parent=5 // pred_region
      %s1656 = ssub.s32 %s22, 2
      // Predicated region
      $region89: #{tpu_custom_call.1} parent=87 // pred_check
        %p1657 = pneg %p313
      $region90: #{tpu_custom_call.1} parent=87 // pred_check_branch
        %1659 = sbr.rel (%p1657) target = $region92
      $region91: #{tpu_custom_call.1} parent=87 // pred_region
        %s1660 = smul.u32 16, %s28
        %p1661 = scmp.lt.s32.totalorder %s1660, 31
        %s1662 = scalar_select %p1661, %s1660, 31
        %s1663 = smul.addr %s1662, 8
        %s1664 = scalar_lea.vmem %s12, %s1663
      $region92: #{tpu_custom_call.1} parent=87 // pred_fallthru
        _
      // Predicated region
      $region93: #{tpu_custom_call.1} parent=87 // pred_check
        %p1665 = pneg %p339
      $region94: #{tpu_custom_call.1} parent=87 // pred_check_branch
        %1667 = sbr.rel (%p1665) target = $region96
      $region95: #{tpu_custom_call.1} parent=87 // pred_region
        %s1668 = smul.u32 16, %s28
        %p1669 = scmp.lt.s32.totalorder %s1668, 31
        %s1670 = scalar_select %p1669, %s1668, 31
        %s1671 = smul.addr %s1670, 8
        %s1672 = scalar_lea.vmem %s13, %s1671
      $region96: #{tpu_custom_call.1} parent=87 // pred_fallthru
        _
      // Predicated region
      $region97: #{tpu_custom_call.1} parent=87 // pred_check
        %p1673 = pneg %p365
      $region98: #{tpu_custom_call.1} parent=87 // pred_check_branch
        %1675 = sbr.rel (%p1673) target = $region100
      $region99: #{tpu_custom_call.1} parent=87 // pred_region
        %s1676 = smul.u32 16, %s28
        %p1677 = scmp.lt.s32.totalorder %s1676, 31
        %s1678 = scalar_select %p1677, %s1676, 31
        %s1679 = smul.addr %s1678, 8
        %s1680 = scalar_lea.vmem %s14, %s1679
      $region100: #{tpu_custom_call.1} parent=87 // pred_fallthru
        _
      // Predicated region
      $region101: #{tpu_custom_call.1} parent=87 // pred_check
        %p1681 = pneg %p391
      $region102: #{tpu_custom_call.1} parent=87 // pred_check_branch
        %1683 = sbr.rel (%p1681) target = $region104
      $region103: #{tpu_custom_call.1} parent=87 // pred_region
        %s1684 = smul.u32 16, %s28
        %p1685 = scmp.lt.s32.totalorder %s1684, 31
        %s1686 = scalar_select %p1685, %s1684, 31
        %s1687 = smul.addr %s1686, 8
        %s1688 = scalar_lea.vmem %s15, %s1687
      $region104: #{tpu_custom_call.1} parent=87 // pred_fallthru
        _
    $region88: #{tpu_custom_call.1} parent=5 // pred_fallthru
      _
  $region6: #{tpu_custom_call.1} parent=0 // loop_footer
    %s26 = sadd.s32 1, %s22
  $region7: #{tpu_custom_call.1} parent=0 // loop_footer_branch
    %21 = sbr.rel target = $region3
  $region8: #{tpu_custom_call.1} parent=0 // loop_exit
    _

</llo_original>
